<compile_context>
chip_gen: v7x
topology: tpu7x:2x2x1
jax: 0.10.0
libtpu: 0.0.40
codegen_flags: <defaults>
</compile_context>

<pallas_src>
import math
import functools

import jax
import jax.numpy as jnp
from jax.experimental import pallas as pl
from jax.experimental.pallas import tpu as pltpu


# ---------------------------------------------------------------------------
# Kernel 1: fused projections.  grid = (B, S/tm); outputs are head-major
# (B, H, S, hd) so kernel 2 needs no relayout.
#   latent = x @ W_latent                  (W_latent = (W_k+W_v)^T W_down^T)
#   q_h    = (x @ WqT_h) * 1/sqrt(D)       (scale folded in once)
#   k_h    = latent @ WupkT_h ; v_h = latent @ WupvT_h
# Weight slabs arrive as (H, in, hd) / (in, out).
# ---------------------------------------------------------------------------
def _proj_kernel(x_ref, wq_ref, wlat_ref, wupk_ref, wupv_ref,
                 q_ref, krec_ref, vrec_ref, lat_ref, *, scale, num_heads):
    f32 = jnp.float32
    x = x_ref[...]                                                  # (tm, D)

    latent = jnp.dot(x, wlat_ref[...], preferred_element_type=f32)  # (tm, dl)
    lat_ref[...] = latent.astype(lat_ref.dtype)
    lat_c = latent.astype(x.dtype)

    # Per-head column slabs: each dot writes its head's (tm, hd) tile directly
    # into the head-major output (no in-kernel reshape/transpose/concatenate).
    for h in range(num_heads):
        q_h = jnp.dot(x, wq_ref[h], preferred_element_type=f32) * scale
        q_ref[h] = q_h.astype(q_ref.dtype)
        krec_ref[h] = jnp.dot(lat_c, wupk_ref[h],
                              preferred_element_type=f32).astype(krec_ref.dtype)
        vrec_ref[h] = jnp.dot(lat_c, wupv_ref[h],
                              preferred_element_type=f32).astype(vrec_ref.dtype)


# ---------------------------------------------------------------------------
# Kernel 2: flash-style attention over head-major (B, H, S, hd) inputs.
# grid = (B, q_blocks, kv_blocks); kv axis is the innermost "arbitrary"
# reduction axis.  W_o is fused into the finalize step.
# ---------------------------------------------------------------------------
def _attn_kernel(q_ref, k_ref, v_ref, wo_ref, o_ref, m_scr, l_scr, acc_scr, *,
                 num_heads, head_dim, d_model, seq_len, block_kv, mask_kv,
                 exp_dtype, approx_recip):
    f32 = jnp.float32
    ki = pl.program_id(2)

    @pl.when(ki == 0)
    def _():
        m_scr[...] = jnp.full_like(m_scr, -jnp.inf)
        l_scr[...] = jnp.zeros_like(l_scr)
        acc_scr[...] = jnp.zeros_like(acc_scr)

    q = q_ref[...]                                   # (H, TQ,  hd)  (pre-scaled)
    k = k_ref[...]                                   # (H, TKV, hd)
    v = v_ref[...]                                   # (H, TKV, hd)

    # Head-batched scores: (H, TQ, TKV).  1/sqrt(D) already folded into q.
    s = jnp.einsum("hqd,hkd->hqk", q, k, preferred_element_type=f32)

    if mask_kv:  # only emitted when S % block_kv != 0
        col = ki * block_kv + jax.lax.broadcasted_iota(jnp.int32, s.shape, 2)
        s = jnp.where(col < seq_len, s, -jnp.inf)

    m_prev = m_scr[...]
    m_new = jnp.maximum(m_prev, jnp.max(s, axis=-1, keepdims=True))
    alpha = jnp.exp(m_prev - m_new)
    # The big exponential runs in bf16 on the bf16 compute path (EUP is the
    # binding slot for hd<=128 on v6e/v7x; p feeds a bf16 matmul anyway).
    # Running max / sum / alpha stay in f32.
    p = jnp.exp((s - m_new).astype(exp_dtype))

    l_scr[...] = alpha * l_scr[...] + jnp.sum(p.astype(f32), axis=-1,
                                              keepdims=True)
    acc_scr[...] = alpha * acc_scr[...] + jnp.einsum(
        "hqk,hkd->hqd", p.astype(v.dtype), v, preferred_element_type=f32)
    m_scr[...] = m_new

    @pl.when(ki == pl.num_programs(2) - 1)
    def _():
        inv_l = pl.reciprocal(l_scr[...], approx=approx_recip)       # EUP
        attn = acc_scr[...] * inv_l                                  # (H, TQ, hd) f32
        cdt = q_ref.dtype
        if head_dim % 128 == 0:
            # Lane-aligned heads: concatenating along lanes is free at
            # hd % 128 == 0; one K=d_model matmul -> full MXU fill.
            cat = jnp.concatenate([attn[h] for h in range(num_heads)],
                                  axis=-1).astype(cdt)               # (TQ, D)
            wo_full = wo_ref[...].reshape(num_heads * head_dim, d_model)
            out = jnp.dot(cat, wo_full, preferred_element_type=f32)
        else:
            # Small-head fallback: independent per-head K=hd dots, summed as a
            # balanced tree (no serial dependent add chain).
            parts = [jnp.dot(attn[h].astype(cdt), wo_ref[h],
                             preferred_element_type=f32)
                     for h in range(num_heads)]
            while len(parts) > 1:
                nxt = [parts[i] + parts[i + 1]
                       for i in range(0, len(parts) - 1, 2)]
                if len(parts) % 2:
                    nxt.append(parts[-1])
                parts = nxt
            out = parts[0]
        o_ref[...] = out.astype(o_ref.dtype)


# ---------------------------------------------------------------------------
# Wrapper
# ---------------------------------------------------------------------------
def mhla_forward(x, params, *, num_heads, memory=None,
                 compute_dtype=jnp.bfloat16,
                 block_rows=256, block_q=512, block_kv=256,
                 vmem_limit_bytes=64 * 1024 * 1024,
                 single_buffer_weights=False):
    """MultiHeadLatentAttention forward (Pallas TPU). Returns (output, latent_kv).

    Tuning guidance (kernel 2 streams K/V once per q block, so its arithmetic
    intensity scales with block_q):
      * v5e/v6e: block_q=512 (v6e can go to 1024 with vmem_limit ~96 MiB),
        block_kv=256.
      * v7x (64 MiB VMEM, 3.2 TB/s HBM): do NOT shrink block_q (that cuts K/V
        reuse); keep block_q at 384-512, shrink block_kv to 128-256 and set
        single_buffer_weights=True so the constant weight slabs (W_o etc.)
        are not double-buffered.
    Lane note: prefer configs with head_dim a multiple of 128 and d_latent a
    multiple of 128 for lane-dense stores; smaller values fall back to masked
    partial stores (correct, slower).
    """
    if memory is not None:
        # TODO(synk): optional `memory` latent-mixing path ((latent+memory)/2)
        # is not implemented; only the memory=None forward path is supported.
        raise NotImplementedError("memory path not implemented")
    # TODO(synk): absorbed-MLA variant (fold W_up_k into q and W_up_v into W_o
    # so kernel 2 streams only the (B,S,d_latent) latent) is a further HBM
    # traffic win for memory-bound configs; not implemented here.

    B, S, D = x.shape
    d_latent = params["W_down_kv"].shape[0]
    assert D % num_heads == 0
    hd = D // num_heads
    scale = 1.0 / math.sqrt(D)          # spec uses 1/sqrt(d_model) (faithful)
    cdt = compute_dtype
    f32 = jnp.float32

    # ---- one-time weight prep (outside the kernels) ----
    # Fold (W_k + W_v)^T @ W_down^T in f32: the full k/v projections are never
    # materialized (only k+v feeds the latent).
    w_latent = ((params["W_k"] + params["W_v"]).T.astype(f32)
                @ params["W_down_kv"].T.astype(f32)).astype(cdt)     # (D, dl)
    # Head-split (in, out)-layout slabs for the per-head projections.
    wq = params["W_q"].T.reshape(D, num_heads, hd).transpose(1, 0, 2).astype(cdt)
    wupk = params["W_up_k"].T.reshape(d_latent, num_heads, hd) \
                            .transpose(1, 0, 2).astype(cdt)          # (H, dl, hd)
    wupv = params["W_up_v"].T.reshape(d_latent, num_heads, hd) \
                            .transpose(1, 0, 2).astype(cdt)          # (H, dl, hd)
    wo = params["W_o"].T.reshape(num_heads, hd, D).astype(cdt)       # (H, hd, D)

    x_c = x.astype(cdt)
    nbuf = 1 if single_buffer_weights else None

    def const_spec(shape, grid_rank):
        zeros = (0,) * len(shape)
        imap = (lambda b, i: zeros) if grid_rank == 2 else (lambda b, qi, ki: zeros)
        if nbuf is None:
            return pl.BlockSpec(shape, imap)
        # Constant-index weights: single buffer halves their VMEM footprint.
        return pl.BlockSpec(shape, imap, pipeline_mode=pl.Buffered(nbuf))

    # ---- Kernel 1: projections, grid (B, S/tm), head-major outputs ----
    tm = min(block_rows, S)
    proj = pl.pallas_call(
        functools.partial(_proj_kernel, scale=scale, num_heads=num_heads),
        out_shape=(
            jax.ShapeDtypeStruct((B, num_heads, S, hd), cdt),   # q (scaled)
            jax.ShapeDtypeStruct((B, num_heads, S, hd), cdt),   # k_rec
            jax.ShapeDtypeStruct((B, num_heads, S, hd), cdt),   # v_rec
            jax.ShapeDtypeStruct((B, S, d_latent), x.dtype),    # latent_kv
        ),
        grid_spec=pltpu.PrefetchScalarGridSpec(
            num_scalar_prefetch=0,
            grid=(B, pl.cdiv(S, tm)),
            in_specs=[
                pl.BlockSpec((None, tm, D), lambda b, i: (b, i, 0)),   # x rows
                const_spec((num_heads, D, hd), 2),                     # WqT slabs
                const_spec((D, d_latent), 2),                          # W_latent
                const_spec((num_heads, d_latent, hd), 2),              # WupkT slabs
                const_spec((num_heads, d_latent, hd), 2),              # WupvT slabs
            ],
            out_specs=(
                pl.BlockSpec((None, num_heads, tm, hd), lambda b, i: (b, 0, i, 0)),
                pl.BlockSpec((None, num_heads, tm, hd), lambda b, i: (b, 0, i, 0)),
                pl.BlockSpec((None, num_heads, tm, hd), lambda b, i: (b, 0, i, 0)),
                pl.BlockSpec((None, tm, d_latent), lambda b, i: (b, i, 0)),
            )),
        compiler_params=pltpu.CompilerParams(
            dimension_semantics=("parallel", "parallel"),
            vmem_limit_bytes=vmem_limit_bytes),
    )
    qh, kh, vh, latent = proj(x_c, wq, w_latent, wupk, wupv)

    # ---- Kernel 2: flash attention + fused W_o ----
    tq = min(block_q, S)
    tkv = min(block_kv, S)
    mask_kv = (S % tkv) != 0
    is_bf16 = jnp.dtype(cdt) == jnp.dtype(jnp.bfloat16)
    exp_dtype = jnp.bfloat16 if is_bf16 else jnp.float32
    approx_recip = jnp.dtype(cdt) != jnp.dtype(jnp.float32)

    attn_fn = pl.pallas_call(
        functools.partial(_attn_kernel, num_heads=num_heads, head_dim=hd,
                          d_model=D, seq_len=S, block_kv=tkv, mask_kv=mask_kv,
                          exp_dtype=exp_dtype, approx_recip=approx_recip),
        out_shape=jax.ShapeDtypeStruct((B, S, D), x.dtype),
        grid_spec=pltpu.PrefetchScalarGridSpec(
            num_scalar_prefetch=0,
            grid=(B, pl.cdiv(S, tq), pl.cdiv(S, tkv)),
            in_specs=[
                pl.BlockSpec((None, num_heads, tq, hd),
                             lambda b, qi, ki: (b, 0, qi, 0)),
                pl.BlockSpec((None, num_heads, tkv, hd),
                             lambda b, qi, ki: (b, 0, ki, 0)),
                pl.BlockSpec((None, num_heads, tkv, hd),
                             lambda b, qi, ki: (b, 0, ki, 0)),
                const_spec((num_heads, hd, D), 3),                     # W_oT slabs
            ],
            out_specs=pl.BlockSpec((None, tq, D), lambda b, qi, ki: (b, qi, 0)),
            scratch_shapes=[
                pltpu.VMEM((num_heads, tq, 1), jnp.float32),   # running max
                pltpu.VMEM((num_heads, tq, 1), jnp.float32),   # running sum
                pltpu.VMEM((num_heads, tq, hd), jnp.float32),  # output accum
            ]),
        compiler_params=pltpu.CompilerParams(
            dimension_semantics=("parallel", "parallel", "arbitrary"),
            vmem_limit_bytes=vmem_limit_bytes),
    )
    out = attn_fn(qh, kh, vh, wo)
    return out, latent


# ---------------------------------------------------------------------------
# Pure-JAX reference mirroring the PyTorch module exactly (memory=None path).
# ---------------------------------------------------------------------------
def mhla_reference(x, params, *, num_heads):
    B, S, D = x.shape
    hd = D // num_heads
    q = x @ params["W_q"].T
    k = x @ params["W_k"].T
    v = x @ params["W_v"].T
    latent = (k + v) @ params["W_down_kv"].T
    k_rec = latent @ params["W_up_k"].T
    v_rec = latent @ params["W_up_v"].T
    qh = q.reshape(B, S, num_heads, hd).transpose(0, 2, 1, 3)
    kh = k_rec.reshape(B, S, num_heads, hd).transpose(0, 2, 1, 3)
    vh = v_rec.reshape(B, S, num_heads, hd).transpose(0, 2, 1, 3)
    scores = jnp.einsum("bhqd,bhkd->bhqk", qh, kh) / math.sqrt(D)
    w = jax.nn.softmax(scores, axis=-1)
    o = jnp.einsum("bhqk,bhkd->bhqd", w, vh)
    o = o.transpose(0, 2, 1, 3).reshape(B, S, D)
    return o @ params["W_o"].T, latent


def init_params(key, d_model, d_latent):
    ks = jax.random.split(key, 8)

    def lin(k, out_f, in_f):
        bound = 1.0 / math.sqrt(in_f)
        return jax.random.uniform(k, (out_f, in_f), jnp.float32, -bound, bound)

    return {
        "W_q": lin(ks[0], d_model, d_model),
        "W_k": lin(ks[1], d_model, d_model),
        "W_v": lin(ks[2], d_model, d_model),
        "W_o": lin(ks[3], d_model, d_model),
        "W_down_kv": lin(ks[4], d_latent, d_model),
        "W_up_k": lin(ks[5], d_model, d_latent),
        "W_up_v": lin(ks[6], d_model, d_latent),
    }


if __name__ == "__main__":
    B, S, d_model, num_heads, d_latent = 2, 8, 32, 4, 16

    key = jax.random.PRNGKey(0)
    kx, kp = jax.random.split(key)
    x = jax.random.normal(kx, (B, S, d_model), jnp.float32)
    params = init_params(kp, d_model, d_latent)

    ref_out, ref_latent = mhla_reference(x, params, num_heads=num_heads)

    # f32 compute path: tight check against the pure-JAX reference
    # (weight fold + reciprocal-multiply are the only rounding differences).
    out, latent = mhla_forward(x, params, num_heads=num_heads,
                               compute_dtype=jnp.float32)
    out = jax.block_until_ready(out)
    latent = jax.block_until_ready(latent)
    assert out.shape == (B, S, d_model)
    assert latent.shape == (B, S, d_latent)
    assert jnp.allclose(out, ref_out, atol=1e-4, rtol=1e-4), "output mismatch (f32)"
    assert jnp.allclose(latent, ref_latent, atol=1e-4, rtol=1e-4), "latent mismatch (f32)"

    # bf16 MXU path (production setting, bf16 exp + approx reciprocal):
    # loose tolerance check.
    out_bf, latent_bf = mhla_forward(x, params, num_heads=num_heads,
                                     compute_dtype=jnp.bfloat16)
    out_bf = jax.block_until_ready(out_bf)
    assert jnp.allclose(out_bf, ref_out, atol=1e-1, rtol=1e-1), "output mismatch (bf16)"

    print("KERNEL_OK")
</pallas_src>

<mosaic_0001>
module attributes {stable_mosaic.version = 11 : i64} {
  func.func @_proj_kernel(%arg0: i32, %arg1: i32, %arg2: memref<1x8x32xf32, #tpu.memory_space<vmem>>, %arg3: memref<4x32x8xf32, #tpu.memory_space<vmem>>, %arg4: memref<32x16xf32, #tpu.memory_space<vmem>>, %arg5: memref<4x16x8xf32, #tpu.memory_space<vmem>>, %arg6: memref<4x16x8xf32, #tpu.memory_space<vmem>>, %arg7: memref<1x4x8x8xf32, #tpu.memory_space<vmem>>, %arg8: memref<1x4x8x8xf32, #tpu.memory_space<vmem>>, %arg9: memref<1x4x8x8xf32, #tpu.memory_space<vmem>>, %arg10: memref<1x8x16xf32, #tpu.memory_space<vmem>>) attributes {dimension_semantics = [#tpu.dimension_semantics<parallel>, #tpu.dimension_semantics<parallel>], iteration_bounds = array<i64: 2, 1>, scalar_prefetch = 0 : i64, scratch_operands = 0 : i64, tpu.core_type = #tpu.core_type<tc>, window_params = [{transform_indices = @transform_0, window_bounds = array<i64: 1, 8, 32>}, {pipeline_mode = #tpu.pipeline_mode<synchronous>, transform_indices = @transform_1, window_bounds = array<i64: 4, 32, 8>}, {pipeline_mode = #tpu.pipeline_mode<synchronous>, transform_indices = @transform_2, window_bounds = array<i64: 32, 16>}, {pipeline_mode = #tpu.pipeline_mode<synchronous>, transform_indices = @transform_3, window_bounds = array<i64: 4, 16, 8>}, {pipeline_mode = #tpu.pipeline_mode<synchronous>, transform_indices = @transform_4, window_bounds = array<i64: 4, 16, 8>}, {transform_indices = @transform_5, window_bounds = array<i64: 1, 4, 8, 8>}, {transform_indices = @transform_6, window_bounds = array<i64: 1, 4, 8, 8>}, {transform_indices = @transform_7, window_bounds = array<i64: 1, 4, 8, 8>}, {transform_indices = @transform_8, window_bounds = array<i64: 1, 8, 16>}]} {
    %c0 = arith.constant 0 : index
    %c0_0 = arith.constant 0 : index
    %c0_1 = arith.constant 0 : index
    %0 = vector.load %arg2[%c0, %c0_0, %c0_1] : memref<1x8x32xf32, #tpu.memory_space<vmem>>, vector<1x8x32xf32>
    %1 = vector.shape_cast %0 : vector<1x8x32xf32> to vector<8x32xf32>
    %c0_2 = arith.constant 0 : index
    %c0_3 = arith.constant 0 : index
    %2 = vector.load %arg4[%c0_2, %c0_3] : memref<32x16xf32, #tpu.memory_space<vmem>>, vector<32x16xf32>
    %cst = arith.constant dense<0.000000e+00> : vector<8x16xf32>
    %3 = tpu.matmul %1, %2, %cst {dimension_numbers = #tpu.dot_dimension_numbers<[1], [0], [0], [1], [0, 0, 1, 1], [], []>} : vector<8x32xf32>, vector<32x16xf32>, vector<8x16xf32> -> vector<8x16xf32>
    %c0_4 = arith.constant 0 : index
    %c0_5 = arith.constant 0 : index
    %c0_6 = arith.constant 0 : index
    %4 = vector.load %arg10[%c0_4, %c0_5, %c0_6] : memref<1x8x16xf32, #tpu.memory_space<vmem>>, vector<1x8x16xf32>
    %5 = vector.shape_cast %4 : vector<1x8x16xf32> to vector<8x16xf32>
    %6 = vector.shape_cast %3 : vector<8x16xf32> to vector<1x8x16xf32>
    tpu.vector_store %arg10[%c0_4, %c0_5, %c0_6], %6 {strides = array<i32>} : memref<1x8x16xf32, #tpu.memory_space<vmem>>, vector<1x8x16xf32>,
    %c0_7 = arith.constant 0 : index
    %c0_8 = arith.constant 0 : index
    %c0_9 = arith.constant 0 : index
    %7 = vector.load %arg3[%c0_7, %c0_8, %c0_9] : memref<4x32x8xf32, #tpu.memory_space<vmem>>, vector<1x32x8xf32>
    %8 = vector.shape_cast %7 : vector<1x32x8xf32> to vector<32x8xf32>
    %cst_10 = arith.constant dense<0.000000e+00> : vector<8x8xf32>
    %9 = tpu.matmul %1, %8, %cst_10 {dimension_numbers = #tpu.dot_dimension_numbers<[1], [0], [0], [1], [0, 0, 1, 1], [], []>} : vector<8x32xf32>, vector<32x8xf32>, vector<8x8xf32> -> vector<8x8xf32>
    %cst_11 = arith.constant 0.176776692 : f32
    %10 = vector.broadcast %cst_11 : f32 to vector<8x8xf32>
    %11 = arith.mulf %9, %10 : vector<8x8xf32>
    %c0_12 = arith.constant 0 : index
    %c0_13 = arith.constant 0 : index
    %c0_14 = arith.constant 0 : index
    %c0_15 = arith.constant 0 : index
    %12 = vector.load %arg7[%c0_12, %c0_13, %c0_14, %c0_15] : memref<1x4x8x8xf32, #tpu.memory_space<vmem>>, vector<1x1x8x8xf32>
    %13 = vector.shape_cast %12 : vector<1x1x8x8xf32> to vector<8x8xf32>
    %14 = vector.shape_cast %11 : vector<8x8xf32> to vector<1x1x8x8xf32>
    tpu.vector_store %arg7[%c0_12, %c0_13, %c0_14, %c0_15], %14 {strides = array<i32>} : memref<1x4x8x8xf32, #tpu.memory_space<vmem>>, vector<1x1x8x8xf32>,
    %c0_16 = arith.constant 0 : index
    %c0_17 = arith.constant 0 : index
    %c0_18 = arith.constant 0 : index
    %15 = vector.load %arg5[%c0_16, %c0_17, %c0_18] : memref<4x16x8xf32, #tpu.memory_space<vmem>>, vector<1x16x8xf32>
    %16 = vector.shape_cast %15 : vector<1x16x8xf32> to vector<16x8xf32>
    %cst_19 = arith.constant dense<0.000000e+00> : vector<8x8xf32>
    %17 = tpu.matmul %3, %16, %cst_19 {dimension_numbers = #tpu.dot_dimension_numbers<[1], [0], [0], [1], [0, 0, 1, 1], [], []>} : vector<8x16xf32>, vector<16x8xf32>, vector<8x8xf32> -> vector<8x8xf32>
    %c0_20 = arith.constant 0 : index
    %c0_21 = arith.constant 0 : index
    %c0_22 = arith.constant 0 : index
    %c0_23 = arith.constant 0 : index
    %18 = vector.load %arg8[%c0_20, %c0_21, %c0_22, %c0_23] : memref<1x4x8x8xf32, #tpu.memory_space<vmem>>, vector<1x1x8x8xf32>
    %19 = vector.shape_cast %18 : vector<1x1x8x8xf32> to vector<8x8xf32>
    %20 = vector.shape_cast %17 : vector<8x8xf32> to vector<1x1x8x8xf32>
    tpu.vector_store %arg8[%c0_20, %c0_21, %c0_22, %c0_23], %20 {strides = array<i32>} : memref<1x4x8x8xf32, #tpu.memory_space<vmem>>, vector<1x1x8x8xf32>,
    %c0_24 = arith.constant 0 : index
    %c0_25 = arith.constant 0 : index
    %c0_26 = arith.constant 0 : index
    %21 = vector.load %arg6[%c0_24, %c0_25, %c0_26] : memref<4x16x8xf32, #tpu.memory_space<vmem>>, vector<1x16x8xf32>
    %22 = vector.shape_cast %21 : vector<1x16x8xf32> to vector<16x8xf32>
    %cst_27 = arith.constant dense<0.000000e+00> : vector<8x8xf32>
    %23 = tpu.matmul %3, %22, %cst_27 {dimension_numbers = #tpu.dot_dimension_numbers<[1], [0], [0], [1], [0, 0, 1, 1], [], []>} : vector<8x16xf32>, vector<16x8xf32>, vector<8x8xf32> -> vector<8x8xf32>
    %c0_28 = arith.constant 0 : index
    %c0_29 = arith.constant 0 : index
    %c0_30 = arith.constant 0 : index
    %c0_31 = arith.constant 0 : index
    %24 = vector.load %arg9[%c0_28, %c0_29, %c0_30, %c0_31] : memref<1x4x8x8xf32, #tpu.memory_space<vmem>>, vector<1x1x8x8xf32>
    %25 = vector.shape_cast %24 : vector<1x1x8x8xf32> to vector<8x8xf32>
    %26 = vector.shape_cast %23 : vector<8x8xf32> to vector<1x1x8x8xf32>
    tpu.vector_store %arg9[%c0_28, %c0_29, %c0_30, %c0_31], %26 {strides = array<i32>} : memref<1x4x8x8xf32, #tpu.memory_space<vmem>>, vector<1x1x8x8xf32>,
    %c1 = arith.constant 1 : index
    %c0_32 = arith.constant 0 : index
    %c0_33 = arith.constant 0 : index
    %27 = vector.load %arg3[%c1, %c0_32, %c0_33] : memref<4x32x8xf32, #tpu.memory_space<vmem>>, vector<1x32x8xf32>
    %28 = vector.shape_cast %27 : vector<1x32x8xf32> to vector<32x8xf32>
    %cst_34 = arith.constant dense<0.000000e+00> : vector<8x8xf32>
    %29 = tpu.matmul %1, %28, %cst_34 {dimension_numbers = #tpu.dot_dimension_numbers<[1], [0], [0], [1], [0, 0, 1, 1], [], []>} : vector<8x32xf32>, vector<32x8xf32>, vector<8x8xf32> -> vector<8x8xf32>
    %cst_35 = arith.constant 0.176776692 : f32
    %30 = vector.broadcast %cst_35 : f32 to vector<8x8xf32>
    %31 = arith.mulf %29, %30 : vector<8x8xf32>
    %c0_36 = arith.constant 0 : index
    %c1_37 = arith.constant 1 : index
    %c0_38 = arith.constant 0 : index
    %c0_39 = arith.constant 0 : index
    %32 = vector.load %arg7[%c0_36, %c1_37, %c0_38, %c0_39] : memref<1x4x8x8xf32, #tpu.memory_space<vmem>>, vector<1x1x8x8xf32>
    %33 = vector.shape_cast %32 : vector<1x1x8x8xf32> to vector<8x8xf32>
    %34 = vector.shape_cast %31 : vector<8x8xf32> to vector<1x1x8x8xf32>
    tpu.vector_store %arg7[%c0_36, %c1_37, %c0_38, %c0_39], %34 {strides = array<i32>} : memref<1x4x8x8xf32, #tpu.memory_space<vmem>>, vector<1x1x8x8xf32>,
    %c1_40 = arith.constant 1 : index
    %c0_41 = arith.constant 0 : index
    %c0_42 = arith.constant 0 : index
    %35 = vector.load %arg5[%c1_40, %c0_41, %c0_42] : memref<4x16x8xf32, #tpu.memory_space<vmem>>, vector<1x16x8xf32>
    %36 = vector.shape_cast %35 : vector<1x16x8xf32> to vector<16x8xf32>
    %cst_43 = arith.constant dense<0.000000e+00> : vector<8x8xf32>
    %37 = tpu.matmul %3, %36, %cst_43 {dimension_numbers = #tpu.dot_dimension_numbers<[1], [0], [0], [1], [0, 0, 1, 1], [], []>} : vector<8x16xf32>, vector<16x8xf32>, vector<8x8xf32> -> vector<8x8xf32>
    %c0_44 = arith.constant 0 : index
    %c1_45 = arith.constant 1 : index
    %c0_46 = arith.constant 0 : index
    %c0_47 = arith.constant 0 : index
    %38 = vector.load %arg8[%c0_44, %c1_45, %c0_46, %c0_47] : memref<1x4x8x8xf32, #tpu.memory_space<vmem>>, vector<1x1x8x8xf32>
    %39 = vector.shape_cast %38 : vector<1x1x8x8xf32> to vector<8x8xf32>
    %40 = vector.shape_cast %37 : vector<8x8xf32> to vector<1x1x8x8xf32>
    tpu.vector_store %arg8[%c0_44, %c1_45, %c0_46, %c0_47], %40 {strides = array<i32>} : memref<1x4x8x8xf32, #tpu.memory_space<vmem>>, vector<1x1x8x8xf32>,
    %c1_48 = arith.constant 1 : index
    %c0_49 = arith.constant 0 : index
    %c0_50 = arith.constant 0 : index
    %41 = vector.load %arg6[%c1_48, %c0_49, %c0_50] : memref<4x16x8xf32, #tpu.memory_space<vmem>>, vector<1x16x8xf32>
    %42 = vector.shape_cast %41 : vector<1x16x8xf32> to vector<16x8xf32>
    %cst_51 = arith.constant dense<0.000000e+00> : vector<8x8xf32>
    %43 = tpu.matmul %3, %42, %cst_51 {dimension_numbers = #tpu.dot_dimension_numbers<[1], [0], [0], [1], [0, 0, 1, 1], [], []>} : vector<8x16xf32>, vector<16x8xf32>, vector<8x8xf32> -> vector<8x8xf32>
    %c0_52 = arith.constant 0 : index
    %c1_53 = arith.constant 1 : index
    %c0_54 = arith.constant 0 : index
    %c0_55 = arith.constant 0 : index
    %44 = vector.load %arg9[%c0_52, %c1_53, %c0_54, %c0_55] : memref<1x4x8x8xf32, #tpu.memory_space<vmem>>, vector<1x1x8x8xf32>
    %45 = vector.shape_cast %44 : vector<1x1x8x8xf32> to vector<8x8xf32>
    %46 = vector.shape_cast %43 : vector<8x8xf32> to vector<1x1x8x8xf32>
    tpu.vector_store %arg9[%c0_52, %c1_53, %c0_54, %c0_55], %46 {strides = array<i32>} : memref<1x4x8x8xf32, #tpu.memory_space<vmem>>, vector<1x1x8x8xf32>,
    %c2 = arith.constant 2 : index
    %c0_56 = arith.constant 0 : index
    %c0_57 = arith.constant 0 : index
    %47 = vector.load %arg3[%c2, %c0_56, %c0_57] : memref<4x32x8xf32, #tpu.memory_space<vmem>>, vector<1x32x8xf32>
    %48 = vector.shape_cast %47 : vector<1x32x8xf32> to vector<32x8xf32>
    %cst_58 = arith.constant dense<0.000000e+00> : vector<8x8xf32>
    %49 = tpu.matmul %1, %48, %cst_58 {dimension_numbers = #tpu.dot_dimension_numbers<[1], [0], [0], [1], [0, 0, 1, 1], [], []>} : vector<8x32xf32>, vector<32x8xf32>, vector<8x8xf32> -> vector<8x8xf32>
    %cst_59 = arith.constant 0.176776692 : f32
    %50 = vector.broadcast %cst_59 : f32 to vector<8x8xf32>
    %51 = arith.mulf %49, %50 : vector<8x8xf32>
    %c0_60 = arith.constant 0 : index
    %c2_61 = arith.constant 2 : index
    %c0_62 = arith.constant 0 : index
    %c0_63 = arith.constant 0 : index
    %52 = vector.load %arg7[%c0_60, %c2_61, %c0_62, %c0_63] : memref<1x4x8x8xf32, #tpu.memory_space<vmem>>, vector<1x1x8x8xf32>
    %53 = vector.shape_cast %52 : vector<1x1x8x8xf32> to vector<8x8xf32>
    %54 = vector.shape_cast %51 : vector<8x8xf32> to vector<1x1x8x8xf32>
    tpu.vector_store %arg7[%c0_60, %c2_61, %c0_62, %c0_63], %54 {strides = array<i32>} : memref<1x4x8x8xf32, #tpu.memory_space<vmem>>, vector<1x1x8x8xf32>,
    %c2_64 = arith.constant 2 : index
    %c0_65 = arith.constant 0 : index
    %c0_66 = arith.constant 0 : index
    %55 = vector.load %arg5[%c2_64, %c0_65, %c0_66] : memref<4x16x8xf32, #tpu.memory_space<vmem>>, vector<1x16x8xf32>
    %56 = vector.shape_cast %55 : vector<1x16x8xf32> to vector<16x8xf32>
    %cst_67 = arith.constant dense<0.000000e+00> : vector<8x8xf32>
    %57 = tpu.matmul %3, %56, %cst_67 {dimension_numbers = #tpu.dot_dimension_numbers<[1], [0], [0], [1], [0, 0, 1, 1], [], []>} : vector<8x16xf32>, vector<16x8xf32>, vector<8x8xf32> -> vector<8x8xf32>
    %c0_68 = arith.constant 0 : index
    %c2_69 = arith.constant 2 : index
    %c0_70 = arith.constant 0 : index
    %c0_71 = arith.constant 0 : index
    %58 = vector.load %arg8[%c0_68, %c2_69, %c0_70, %c0_71] : memref<1x4x8x8xf32, #tpu.memory_space<vmem>>, vector<1x1x8x8xf32>
    %59 = vector.shape_cast %58 : vector<1x1x8x8xf32> to vector<8x8xf32>
    %60 = vector.shape_cast %57 : vector<8x8xf32> to vector<1x1x8x8xf32>
    tpu.vector_store %arg8[%c0_68, %c2_69, %c0_70, %c0_71], %60 {strides = array<i32>} : memref<1x4x8x8xf32, #tpu.memory_space<vmem>>, vector<1x1x8x8xf32>,
    %c2_72 = arith.constant 2 : index
    %c0_73 = arith.constant 0 : index
    %c0_74 = arith.constant 0 : index
    %61 = vector.load %arg6[%c2_72, %c0_73, %c0_74] : memref<4x16x8xf32, #tpu.memory_space<vmem>>, vector<1x16x8xf32>
    %62 = vector.shape_cast %61 : vector<1x16x8xf32> to vector<16x8xf32>
    %cst_75 = arith.constant dense<0.000000e+00> : vector<8x8xf32>
    %63 = tpu.matmul %3, %62, %cst_75 {dimension_numbers = #tpu.dot_dimension_numbers<[1], [0], [0], [1], [0, 0, 1, 1], [], []>} : vector<8x16xf32>, vector<16x8xf32>, vector<8x8xf32> -> vector<8x8xf32>
    %c0_76 = arith.constant 0 : index
    %c2_77 = arith.constant 2 : index
    %c0_78 = arith.constant 0 : index
    %c0_79 = arith.constant 0 : index
    %64 = vector.load %arg9[%c0_76, %c2_77, %c0_78, %c0_79] : memref<1x4x8x8xf32, #tpu.memory_space<vmem>>, vector<1x1x8x8xf32>
    %65 = vector.shape_cast %64 : vector<1x1x8x8xf32> to vector<8x8xf32>
    %66 = vector.shape_cast %63 : vector<8x8xf32> to vector<1x1x8x8xf32>
    tpu.vector_store %arg9[%c0_76, %c2_77, %c0_78, %c0_79], %66 {strides = array<i32>} : memref<1x4x8x8xf32, #tpu.memory_space<vmem>>, vector<1x1x8x8xf32>,
    %c3 = arith.constant 3 : index
    %c0_80 = arith.constant 0 : index
    %c0_81 = arith.constant 0 : index
    %67 = vector.load %arg3[%c3, %c0_80, %c0_81] : memref<4x32x8xf32, #tpu.memory_space<vmem>>, vector<1x32x8xf32>
    %68 = vector.shape_cast %67 : vector<1x32x8xf32> to vector<32x8xf32>
    %cst_82 = arith.constant dense<0.000000e+00> : vector<8x8xf32>
    %69 = tpu.matmul %1, %68, %cst_82 {dimension_numbers = #tpu.dot_dimension_numbers<[1], [0], [0], [1], [0, 0, 1, 1], [], []>} : vector<8x32xf32>, vector<32x8xf32>, vector<8x8xf32> -> vector<8x8xf32>
    %cst_83 = arith.constant 0.176776692 : f32
    %70 = vector.broadcast %cst_83 : f32 to vector<8x8xf32>
    %71 = arith.mulf %69, %70 : vector<8x8xf32>
    %c0_84 = arith.constant 0 : index
    %c3_85 = arith.constant 3 : index
    %c0_86 = arith.constant 0 : index
    %c0_87 = arith.constant 0 : index
    %72 = vector.load %arg7[%c0_84, %c3_85, %c0_86, %c0_87] : memref<1x4x8x8xf32, #tpu.memory_space<vmem>>, vector<1x1x8x8xf32>
    %73 = vector.shape_cast %72 : vector<1x1x8x8xf32> to vector<8x8xf32>
    %74 = vector.shape_cast %71 : vector<8x8xf32> to vector<1x1x8x8xf32>
    tpu.vector_store %arg7[%c0_84, %c3_85, %c0_86, %c0_87], %74 {strides = array<i32>} : memref<1x4x8x8xf32, #tpu.memory_space<vmem>>, vector<1x1x8x8xf32>,
    %c3_88 = arith.constant 3 : index
    %c0_89 = arith.constant 0 : index
    %c0_90 = arith.constant 0 : index
    %75 = vector.load %arg5[%c3_88, %c0_89, %c0_90] : memref<4x16x8xf32, #tpu.memory_space<vmem>>, vector<1x16x8xf32>
    %76 = vector.shape_cast %75 : vector<1x16x8xf32> to vector<16x8xf32>
    %cst_91 = arith.constant dense<0.000000e+00> : vector<8x8xf32>
    %77 = tpu.matmul %3, %76, %cst_91 {dimension_numbers = #tpu.dot_dimension_numbers<[1], [0], [0], [1], [0, 0, 1, 1], [], []>} : vector<8x16xf32>, vector<16x8xf32>, vector<8x8xf32> -> vector<8x8xf32>
    %c0_92 = arith.constant 0 : index
    %c3_93 = arith.constant 3 : index
    %c0_94 = arith.constant 0 : index
    %c0_95 = arith.constant 0 : index
    %78 = vector.load %arg8[%c0_92, %c3_93, %c0_94, %c0_95] : memref<1x4x8x8xf32, #tpu.memory_space<vmem>>, vector<1x1x8x8xf32>
    %79 = vector.shape_cast %78 : vector<1x1x8x8xf32> to vector<8x8xf32>
    %80 = vector.shape_cast %77 : vector<8x8xf32> to vector<1x1x8x8xf32>
    tpu.vector_store %arg8[%c0_92, %c3_93, %c0_94, %c0_95], %80 {strides = array<i32>} : memref<1x4x8x8xf32, #tpu.memory_space<vmem>>, vector<1x1x8x8xf32>,
    %c3_96 = arith.constant 3 : index
    %c0_97 = arith.constant 0 : index
    %c0_98 = arith.constant 0 : index
    %81 = vector.load %arg6[%c3_96, %c0_97, %c0_98] : memref<4x16x8xf32, #tpu.memory_space<vmem>>, vector<1x16x8xf32>
    %82 = vector.shape_cast %81 : vector<1x16x8xf32> to vector<16x8xf32>
    %cst_99 = arith.constant dense<0.000000e+00> : vector<8x8xf32>
    %83 = tpu.matmul %3, %82, %cst_99 {dimension_numbers = #tpu.dot_dimension_numbers<[1], [0], [0], [1], [0, 0, 1, 1], [], []>} : vector<8x16xf32>, vector<16x8xf32>, vector<8x8xf32> -> vector<8x8xf32>
    %c0_100 = arith.constant 0 : index
    %c3_101 = arith.constant 3 : index
    %c0_102 = arith.constant 0 : index
    %c0_103 = arith.constant 0 : index
    %84 = vector.load %arg9[%c0_100, %c3_101, %c0_102, %c0_103] : memref<1x4x8x8xf32, #tpu.memory_space<vmem>>, vector<1x1x8x8xf32>
    %85 = vector.shape_cast %84 : vector<1x1x8x8xf32> to vector<8x8xf32>
    %86 = vector.shape_cast %83 : vector<8x8xf32> to vector<1x1x8x8xf32>
    tpu.vector_store %arg9[%c0_100, %c3_101, %c0_102, %c0_103], %86 {strides = array<i32>} : memref<1x4x8x8xf32, #tpu.memory_space<vmem>>, vector<1x1x8x8xf32>,
    return
  }
  func.func @transform_0(%arg0: i32, %arg1: i32) -> (i32, i32, i32) {
    %c0_i32 = arith.constant 0 : i32
    %c0_i32_0 = arith.constant 0 : i32
    return %arg0, %arg1, %c0_i32 : i32, i32, i32
  }
  func.func @transform_1(%arg0: i32, %arg1: i32) -> (i32, i32, i32) {
    %c0_i32 = arith.constant 0 : i32
    %c0_i32_0 = arith.constant 0 : i32
    %c0_i32_1 = arith.constant 0 : i32
    %c0_i32_2 = arith.constant 0 : i32
    return %c0_i32, %c0_i32_0, %c0_i32_1 : i32, i32, i32
  }
  func.func @transform_2(%arg0: i32, %arg1: i32) -> (i32, i32) {
    %c0_i32 = arith.constant 0 : i32
    %c0_i32_0 = arith.constant 0 : i32
    %c0_i32_1 = arith.constant 0 : i32
    return %c0_i32, %c0_i32_0 : i32, i32
  }
  func.func @transform_3(%arg0: i32, %arg1: i32) -> (i32, i32, i32) {
    %c0_i32 = arith.constant 0 : i32
    %c0_i32_0 = arith.constant 0 : i32
    %c0_i32_1 = arith.constant 0 : i32
    %c0_i32_2 = arith.constant 0 : i32
    return %c0_i32, %c0_i32_0, %c0_i32_1 : i32, i32, i32
  }
  func.func @transform_4(%arg0: i32, %arg1: i32) -> (i32, i32, i32) {
    %c0_i32 = arith.constant 0 : i32
    %c0_i32_0 = arith.constant 0 : i32
    %c0_i32_1 = arith.constant 0 : i32
    %c0_i32_2 = arith.constant 0 : i32
    return %c0_i32, %c0_i32_0, %c0_i32_1 : i32, i32, i32
  }
  func.func @transform_5(%arg0: i32, %arg1: i32) -> (i32, i32, i32, i32) {
    %c0_i32 = arith.constant 0 : i32
    %c0_i32_0 = arith.constant 0 : i32
    %c0_i32_1 = arith.constant 0 : i32
    return %arg0, %c0_i32, %arg1, %c0_i32_0 : i32, i32, i32, i32
  }
  func.func @transform_6(%arg0: i32, %arg1: i32) -> (i32, i32, i32, i32) {
    %c0_i32 = arith.constant 0 : i32
    %c0_i32_0 = arith.constant 0 : i32
    %c0_i32_1 = arith.constant 0 : i32
    return %arg0, %c0_i32, %arg1, %c0_i32_0 : i32, i32, i32, i32
  }
  func.func @transform_7(%arg0: i32, %arg1: i32) -> (i32, i32, i32, i32) {
    %c0_i32 = arith.constant 0 : i32
    %c0_i32_0 = arith.constant 0 : i32
    %c0_i32_1 = arith.constant 0 : i32
    return %arg0, %c0_i32, %arg1, %c0_i32_0 : i32, i32, i32, i32
  }
  func.func @transform_8(%arg0: i32, %arg1: i32) -> (i32, i32, i32) {
    %c0_i32 = arith.constant 0 : i32
    %c0_i32_0 = arith.constant 0 : i32
    return %arg0, %arg1, %c0_i32 : i32, i32, i32
  }
}

</mosaic_0001>

<llo_original>
// kernel: tpu_custom_call.1
$region0: #{tpu_custom_call.1}
  #allocation0 [shape = 'u32[]', space=smem, size = 0x4, offset = 0x4, fixed_abs, tag = 'smem constant byte address 0x4 - core index']
  #allocation1 [shape = 'u32[144,128]{1,0:T(1,128)}', space=vmem, size = 0x12000, scoped, tag = 'internal scratch']
  %s0 = inlined_call_operand.hbm [shape: f32[2,8,32], index: 0, kind: input, shape index: {}]
  %s1 = inlined_call_operand.hbm [shape: f32[4,32,8], index: 1, kind: input, shape index: {}]
  %s2 = inlined_call_operand.hbm [shape: f32[32,16], index: 2, kind: input, shape index: {}]
  %s3 = inlined_call_operand.hbm [shape: f32[4,16,8], index: 3, kind: input, shape index: {}]
  %s4 = inlined_call_operand.hbm [shape: f32[4,16,8], index: 4, kind: input, shape index: {}]
  %s5 = inlined_call_operand.hbm [shape: f32[2,4,8,8], index: 5, kind: output, shape index: {0}]
  %s6 = inlined_call_operand.hbm [shape: f32[2,4,8,8], index: 6, kind: output, shape index: {1}]
  %s7 = inlined_call_operand.hbm [shape: f32[2,4,8,8], index: 7, kind: output, shape index: {2}]
  %s8 = inlined_call_operand.hbm [shape: f32[2,8,16], index: 8, kind: output, shape index: {3}]
  %9 = xla_tuple %s5, %s6, %s7, %s8
  %s10 = sld [smem:[#allocation0]]
  $region97: #{tpu_custom_call.1} parent=0
    _
  %s12 = ssub.s32 1, %s10
  %s13 = scalar_select 0, %s12, %s10
  $region1: #{tpu_custom_call.1} parent=0
    #allocation2 [shape = 'u8[8192]{0}', space=vmem, size = 0x2000, scoped, tag = 'input window, operand 0']
    #allocation3 [shape = 's32[2]{0}', space=sflag, size = 0x8, scoped, tag = 'scoped memory for tpu_custom_call.1']
    #allocation4 [shape = 's32[2]{0}', space=sflag, size = 0x8, scoped, tag = 'scoped memory for tpu_custom_call.1']
    #allocation5 [shape = 'u8[65536]{0}', space=vmem, size = 0x10000, scoped, tag = 'input window, operand 1, single buffered']
    #allocation6 [shape = 's32[1]{0}', space=sflag, size = 0x4, scoped, tag = 'scoped memory for tpu_custom_call.1']
    #allocation7 [shape = 'u8[16384]{0}', space=vmem, size = 0x4000, scoped, tag = 'input window, operand 2, single buffered']
    #allocation8 [shape = 'u8[32768]{0}', space=vmem, size = 0x8000, scoped, tag = 'input window, operand 3, single buffered']
    #allocation9 [shape = 's32[1]{0}', space=sflag, size = 0x4, scoped, tag = 'scoped memory for tpu_custom_call.1']
    #allocation10 [shape = 'u8[32768]{0}', space=vmem, size = 0x8000, scoped, tag = 'input window, operand 4, single buffered']
    #allocation11 [shape = 'u8[32768]{0}', space=vmem, size = 0x8000, scoped, tag = 'output window, operand 0']
    #allocation12 [shape = 'u8[32768]{0}', space=vmem, size = 0x8000, scoped, tag = 'output window, operand 1']
    #allocation13 [shape = 's32[2]{0}', space=sflag, size = 0x8, scoped, tag = 'scoped memory for tpu_custom_call.1']
    #allocation14 [shape = 'u8[32768]{0}', space=vmem, size = 0x8000, scoped, tag = 'output window, operand 2']
    #allocation15 [shape = 'u8[8192]{0}', space=vmem, size = 0x2000, scoped, tag = 'output window, operand 3']
    #allocation16 [shape = 's32[2]{0}', space=sflag, size = 0x8, scoped, tag = 'scoped memory for tpu_custom_call.1']
    %14 = vsyncpa [#allocation3], 0
    %s15 = scalar_lea.sflag [#allocation3], 1
    %16 = vsyncpa %s15, 0
    %17 = vsyncpa [#allocation6], 0
    %18 = vsyncpa [#allocation9], 0
    %19 = vsyncpa [#allocation4], 0
    %s20 = scalar_lea.sflag [#allocation4], 1
    %21 = vsyncpa %s20, 0
    %22 = vsyncpa [#allocation13], 0
    %s23 = scalar_lea.sflag [#allocation13], 1
    %24 = vsyncpa %s23, 0
    %25 = vsyncpa [#allocation16], 0
    %s26 = scalar_lea.sflag [#allocation16], 1
    %27 = vsyncpa %s26, 0
    loop: start=0, step=1, limit=4
    $region2: #{tpu_custom_call.1} parent=1 // loop_pre_header
      _
    $region3: #{tpu_custom_call.1} parent=1 // loop_header
      %s29 = sphi 0, %s33
      %p30 = scmp.ge.s32.totalorder %s29, 4
      %s36 = sphi 0, %s48
      %s37 = sphi 0, %s44
      %s38 = sphi 0, %s36
      %s39 = sphi 0, %s37
      %s40 = sphi 0, %s38
      %s41 = sphi 0, %s39
      %s53 = sphi 0, %s55
      %s56 = sphi 0, %s53
      %s57 = sphi 0, %s56
      %s73 = sphi 0, %s57
      %s77 = sphi 0, %s77
      %s79 = sphi 0, %s77
      %s80 = sphi 0, %s79
      %s94 = sphi 0, %s80
      %s98 = sphi 0, %s98
      %s100 = sphi 0, %s98
      %s101 = sphi 0, %s100
      %s115 = sphi 0, %s101
      %s119 = sphi 0, %s119
      %s121 = sphi 0, %s119
      %s122 = sphi 0, %s121
      %s136 = sphi 0, %s122
      %s140 = sphi 0, %s140
      %s142 = sphi 0, %s140
      %s143 = sphi 0, %s142
      %s157 = sphi 0, %s143
      %s165 = sphi 0, %s167
      %s168 = sphi 0, %s165
      %s169 = sphi 0, %s168
      %s185 = sphi 0, %s169
      %s193 = sphi 0, %s195
      %s196 = sphi 0, %s193
      %s197 = sphi 0, %s196
      %s213 = sphi 0, %s197
      %s221 = sphi 0, %s223
      %s224 = sphi 0, %s221
      %s225 = sphi 0, %s224
      %s241 = sphi 0, %s225
      %s249 = sphi 0, %s251
      %s252 = sphi 0, %s249
      %s253 = sphi 0, %s252
      %s269 = sphi 0, %s253
    $region4: #{tpu_custom_call.1} parent=1 // loop_header_branch
      %32 = sbr.rel (%p30) target = $region8
    $region5: #{tpu_custom_call.1} parent=1 // loop_body
      %s34 = ssub.s32 %s29, 1
      %s35 = ssub.s32 %s29, 2
      %s42 = sadd.s32 1, %s37
      %p43 = scmp.ge.s32.totalorder %s42, 1
      %s44 = scalar_select %p43, 0, %s42
      %s45 = sadd.s32 1, %s36
      %s46 = scalar_select %p43, %s45, %s36
      %p47 = scmp.ge.s32.totalorder %s46, 2
      %s48 = scalar_select %p47, 0, %s46
      %s49 = ssub.s32 %s36, %s48
      %s50 = ssub.s32 %s37, %s44
      %s51 = sor.u32 %s49, %s50
      %p52 = scmp.eq.s32.totalorder %s51, 0
      %s54 = sadd.s32 %s53, 1
      %s55 = scalar_select %p52, %s53, %s54
      %p58 = pneg %p52
      %p59 = scmp.eq.s32.totalorder %s29, 1
      %p60 = por %p58, %p59
      %p61 = scmp.ne.s32.totalorder %s53, %s56
      %p62 = scmp.eq.s32.totalorder %s29, 0
      %p63 = por %p61, %p62
      %p64 = scmp.ne.s32.totalorder %s53, %s56
      %p65 = scmp.eq.s32.totalorder %s34, 1
      %p66 = por %p64, %p65
      %p67 = scmp.ne.s32.totalorder %s56, %s57
      %p68 = scmp.eq.s32.totalorder %s34, 0
      %p69 = por %p67, %p68
      %p70 = scmp.ne.s32.totalorder %s56, %s57
      %p71 = scmp.eq.s32.totalorder %s35, 1
      %p72 = por %p70, %p71
      %p74 = scmp.ne.s32.totalorder %s57, %s73
      %p75 = scmp.eq.s32.totalorder %s35, 0
      %p76 = por %p74, %p75
      %s78 = sadd.s32 %s77, 1
      %p81 = scmp.eq.s32.totalorder %s29, 1
      %p82 = scmp.ne.s32.totalorder %s77, %s79
      %p83 = scmp.eq.s32.totalorder %s29, 0
      %p84 = por %p82, %p83
      %p85 = scmp.ne.s32.totalorder %s77, %s79
      %p86 = scmp.eq.s32.totalorder %s34, 1
      %p87 = por %p85, %p86
      %p88 = scmp.ne.s32.totalorder %s79, %s80
      %p89 = scmp.eq.s32.totalorder %s34, 0
      %p90 = por %p88, %p89
      %p91 = scmp.ne.s32.totalorder %s79, %s80
      %p92 = scmp.eq.s32.totalorder %s35, 1
      %p93 = por %p91, %p92
      %p95 = scmp.ne.s32.totalorder %s80, %s94
      %p96 = scmp.eq.s32.totalorder %s35, 0
      %p97 = por %p95, %p96
      %s99 = sadd.s32 %s98, 1
      %p102 = scmp.eq.s32.totalorder %s29, 1
      %p103 = scmp.ne.s32.totalorder %s98, %s100
      %p104 = scmp.eq.s32.totalorder %s29, 0
      %p105 = por %p103, %p104
      %p106 = scmp.ne.s32.totalorder %s98, %s100
      %p107 = scmp.eq.s32.totalorder %s34, 1
      %p108 = por %p106, %p107
      %p109 = scmp.ne.s32.totalorder %s100, %s101
      %p110 = scmp.eq.s32.totalorder %s34, 0
      %p111 = por %p109, %p110
      %p112 = scmp.ne.s32.totalorder %s100, %s101
      %p113 = scmp.eq.s32.totalorder %s35, 1
      %p114 = por %p112, %p113
      %p116 = scmp.ne.s32.totalorder %s101, %s115
      %p117 = scmp.eq.s32.totalorder %s35, 0
      %p118 = por %p116, %p117
      %s120 = sadd.s32 %s119, 1
      %p123 = scmp.eq.s32.totalorder %s29, 1
      %p124 = scmp.ne.s32.totalorder %s119, %s121
      %p125 = scmp.eq.s32.totalorder %s29, 0
      %p126 = por %p124, %p125
      %p127 = scmp.ne.s32.totalorder %s119, %s121
      %p128 = scmp.eq.s32.totalorder %s34, 1
      %p129 = por %p127, %p128
      %p130 = scmp.ne.s32.totalorder %s121, %s122
      %p131 = scmp.eq.s32.totalorder %s34, 0
      %p132 = por %p130, %p131
      %p133 = scmp.ne.s32.totalorder %s121, %s122
      %p134 = scmp.eq.s32.totalorder %s35, 1
      %p135 = por %p133, %p134
      %p137 = scmp.ne.s32.totalorder %s122, %s136
      %p138 = scmp.eq.s32.totalorder %s35, 0
      %p139 = por %p137, %p138
      %s141 = sadd.s32 %s140, 1
      %p144 = scmp.eq.s32.totalorder %s29, 1
      %p145 = scmp.ne.s32.totalorder %s140, %s142
      %p146 = scmp.eq.s32.totalorder %s29, 0
      %p147 = por %p145, %p146
      %p148 = scmp.ne.s32.totalorder %s140, %s142
      %p149 = scmp.eq.s32.totalorder %s34, 1
      %p150 = por %p148, %p149
      %p151 = scmp.ne.s32.totalorder %s142, %s143
      %p152 = scmp.eq.s32.totalorder %s34, 0
      %p153 = por %p151, %p152
      %p154 = scmp.ne.s32.totalorder %s142, %s143
      %p155 = scmp.eq.s32.totalorder %s35, 1
      %p156 = por %p154, %p155
      %p158 = scmp.ne.s32.totalorder %s143, %s157
      %p159 = scmp.eq.s32.totalorder %s35, 0
      %p160 = por %p158, %p159
      %s161 = ssub.s32 %s36, %s48
      %s162 = ssub.s32 %s37, %s44
      %s163 = sor.u32 %s161, %s162
      %p164 = scmp.eq.s32.totalorder %s163, 0
      %s166 = sadd.s32 %s165, 1
      %s167 = scalar_select %p164, %s165, %s166
      %p170 = pneg %p164
      %p171 = scmp.eq.s32.totalorder %s29, 1
      %p172 = por %p170, %p171
      %p173 = scmp.ne.s32.totalorder %s165, %s168
      %p174 = scmp.eq.s32.totalorder %s29, 0
      %p175 = por %p173, %p174
      %p176 = scmp.ne.s32.totalorder %s165, %s168
      %p177 = scmp.eq.s32.totalorder %s34, 1
      %p178 = por %p176, %p177
      %p179 = scmp.ne.s32.totalorder %s168, %s169
      %p180 = scmp.eq.s32.totalorder %s34, 0
      %p181 = por %p179, %p180
      %p182 = scmp.ne.s32.totalorder %s168, %s169
      %p183 = scmp.eq.s32.totalorder %s35, 1
      %p184 = por %p182, %p183
      %p186 = scmp.ne.s32.totalorder %s169, %s185
      %p187 = scmp.eq.s32.totalorder %s35, 0
      %p188 = por %p186, %p187
      %s189 = ssub.s32 %s36, %s48
      %s190 = ssub.s32 %s37, %s44
      %s191 = sor.u32 %s189, %s190
      %p192 = scmp.eq.s32.totalorder %s191, 0
      %s194 = sadd.s32 %s193, 1
      %s195 = scalar_select %p192, %s193, %s194
      %p198 = pneg %p192
      %p199 = scmp.eq.s32.totalorder %s29, 1
      %p200 = por %p198, %p199
      %p201 = scmp.ne.s32.totalorder %s193, %s196
      %p202 = scmp.eq.s32.totalorder %s29, 0
      %p203 = por %p201, %p202
      %p204 = scmp.ne.s32.totalorder %s193, %s196
      %p205 = scmp.eq.s32.totalorder %s34, 1
      %p206 = por %p204, %p205
      %p207 = scmp.ne.s32.totalorder %s196, %s197
      %p208 = scmp.eq.s32.totalorder %s34, 0
      %p209 = por %p207, %p208
      %p210 = scmp.ne.s32.totalorder %s196, %s197
      %p211 = scmp.eq.s32.totalorder %s35, 1
      %p212 = por %p210, %p211
      %p214 = scmp.ne.s32.totalorder %s197, %s213
      %p215 = scmp.eq.s32.totalorder %s35, 0
      %p216 = por %p214, %p215
      %s217 = ssub.s32 %s36, %s48
      %s218 = ssub.s32 %s37, %s44
      %s219 = sor.u32 %s217, %s218
      %p220 = scmp.eq.s32.totalorder %s219, 0
      %s222 = sadd.s32 %s221, 1
      %s223 = scalar_select %p220, %s221, %s222
      %p226 = pneg %p220
      %p227 = scmp.eq.s32.totalorder %s29, 1
      %p228 = por %p226, %p227
      %p229 = scmp.ne.s32.totalorder %s221, %s224
      %p230 = scmp.eq.s32.totalorder %s29, 0
      %p231 = por %p229, %p230
      %p232 = scmp.ne.s32.totalorder %s221, %s224
      %p233 = scmp.eq.s32.totalorder %s34, 1
      %p234 = por %p232, %p233
      %p235 = scmp.ne.s32.totalorder %s224, %s225
      %p236 = scmp.eq.s32.totalorder %s34, 0
      %p237 = por %p235, %p236
      %p238 = scmp.ne.s32.totalorder %s224, %s225
      %p239 = scmp.eq.s32.totalorder %s35, 1
      %p240 = por %p238, %p239
      %p242 = scmp.ne.s32.totalorder %s225, %s241
      %p243 = scmp.eq.s32.totalorder %s35, 0
      %p244 = por %p242, %p243
      %s245 = ssub.s32 %s36, %s48
      %s246 = ssub.s32 %s37, %s44
      %s247 = sor.u32 %s245, %s246
      %p248 = scmp.eq.s32.totalorder %s247, 0
      %s250 = sadd.s32 %s249, 1
      %s251 = scalar_select %p248, %s249, %s250
      %p254 = pneg %p248
      %p255 = scmp.eq.s32.totalorder %s29, 1
      %p256 = por %p254, %p255
      %p257 = scmp.ne.s32.totalorder %s249, %s252
      %p258 = scmp.eq.s32.totalorder %s29, 0
      %p259 = por %p257, %p258
      %p260 = scmp.ne.s32.totalorder %s249, %s252
      %p261 = scmp.eq.s32.totalorder %s34, 1
      %p262 = por %p260, %p261
      %p263 = scmp.ne.s32.totalorder %s252, %s253
      %p264 = scmp.eq.s32.totalorder %s34, 0
      %p265 = por %p263, %p264
      %p266 = scmp.ne.s32.totalorder %s252, %s253
      %p267 = scmp.eq.s32.totalorder %s35, 1
      %p268 = por %p266, %p267
      %p270 = scmp.ne.s32.totalorder %s253, %s269
      %p271 = scmp.eq.s32.totalorder %s35, 0
      %p272 = por %p270, %p271
      %p273 = scmp.le.s32.totalorder 1, %s29
      %p274 = scmp.lt.s32.totalorder %s29, 3
      %p275 = pnand %p273, %p274
      %p276 = pneg %p275
      // Predicated region
      $region9: #{tpu_custom_call.1} parent=5 // pred_check
        _
      $region10: #{tpu_custom_call.1} parent=5 // pred_check_branch
        %278 = sbr.rel (%p275) target = $region12
      $region11: #{tpu_custom_call.1} parent=5 // pred_region
        %s279 = ssub.s32 %s29, 1
        // Predicated region
        $region13: #{tpu_custom_call.1} parent=11 // pred_check
          %p280 = pneg %p90
        $region14: #{tpu_custom_call.1} parent=11 // pred_check_branch
          %282 = sbr.rel (%p280) target = $region16
        $region15: #{tpu_custom_call.1} parent=11 // pred_region
          %s284 = ssub.s32 2048, 2048
          %285 = vsyncadd [#allocation6], %s284
          %s286 = sshll.u32 [#allocation5], 4
          %s287 = int_to_ptr.vmem [resolvable:$true] %s286
          %292 = dma.hbm_to_vmem [thread:$0]  %s1, 2048, %s287, [#allocation6], 128, 128, 8
        $region16: #{tpu_custom_call.1} parent=11 // pred_fallthru
          _
        // Predicated region
        $region17: #{tpu_custom_call.1} parent=11 // pred_check
          %p293 = pneg %p111
        $region18: #{tpu_custom_call.1} parent=11 // pred_check_branch
          %295 = sbr.rel (%p293) target = $region20
        $region19: #{tpu_custom_call.1} parent=11 // pred_region
          %s297 = ssub.s32 512, 512
          %298 = vsyncadd [#allocation6], %s297
          %s299 = sshll.u32 [#allocation7], 4
          %s300 = int_to_ptr.vmem [resolvable:$true] %s299
          %305 = dma.hbm_to_vmem [thread:$0]  %s2, 512, %s300, [#allocation6], 128, 128, 8
        $region20: #{tpu_custom_call.1} parent=11 // pred_fallthru
          _
        // Predicated region
        $region21: #{tpu_custom_call.1} parent=11 // pred_check
          %p306 = pneg %p132
        $region22: #{tpu_custom_call.1} parent=11 // pred_check_branch
          %308 = sbr.rel (%p306) target = $region24
        $region23: #{tpu_custom_call.1} parent=11 // pred_region
          %s310 = ssub.s32 1024, 1024
          %311 = vsyncadd [#allocation9], %s310
          %s312 = sshll.u32 [#allocation8], 4
          %s313 = int_to_ptr.vmem [resolvable:$true] %s312
          %318 = dma.hbm_to_vmem [thread:$0]  %s3, 1024, %s313, [#allocation9], 128, 128, 8
        $region24: #{tpu_custom_call.1} parent=11 // pred_fallthru
          _
        // Predicated region
        $region25: #{tpu_custom_call.1} parent=11 // pred_check
          %p319 = pneg %p153
        $region26: #{tpu_custom_call.1} parent=11 // pred_check_branch
          %321 = sbr.rel (%p319) target = $region28
        $region27: #{tpu_custom_call.1} parent=11 // pred_region
          %s323 = ssub.s32 1024, 1024
          %324 = vsyncadd [#allocation9], %s323
          %s325 = sshll.u32 [#allocation10], 4
          %s326 = int_to_ptr.vmem [resolvable:$true] %s325
          %331 = dma.hbm_to_vmem [thread:$0]  %s4, 1024, %s326, [#allocation9], 128, 128, 8
        $region28: #{tpu_custom_call.1} parent=11 // pred_fallthru
          _
      $region12: #{tpu_custom_call.1} parent=5 // pred_fallthru
        _
      %p332 = scmp.lt.s32.totalorder %s29, 2
      // Predicated region
      $region29: #{tpu_custom_call.1} parent=5 // pred_check
        %p333 = pneg %p332
      $region30: #{tpu_custom_call.1} parent=5 // pred_check_branch
        %335 = sbr.rel (%p333) target = $region32
      $region31: #{tpu_custom_call.1} parent=5 // pred_region
        // Predicated region
        $region33: #{tpu_custom_call.1} parent=31 // pred_check
          %p336 = pneg %p63
        $region34: #{tpu_custom_call.1} parent=31 // pred_check_branch
          %338 = sbr.rel (%p336) target = $region36
        $region35: #{tpu_custom_call.1} parent=31 // pred_region
          %s339 = sand.u32 %s53, 1
          %s340 = scalar_lea.sflag [#allocation3], %s339
          %s341 = sand.u32 %s53, 1
          %s342 = smul.addr %s341, 8
          %s343 = scalar_lea.vmem [#allocation2], %s342
          %s345 = ssub.s32 128, 128
          %346 = vsyncadd %s340, %s345
          %s347 = sadd.s32 %s37, %s36
          %s348 = smul.addr %s347, 128
          %s349 = scalar_lea.hbm %s0, %s348
          %s351 = sshll.u32 %s343, 4
          %s352 = int_to_ptr.vmem [resolvable:$true] %s351
          %354 = dma.hbm_to_vmem [thread:$0]  %s349, 128, %s352, %s340
        $region36: #{tpu_custom_call.1} parent=31 // pred_fallthru
          _
      $region32: #{tpu_custom_call.1} parent=5 // pred_fallthru
        _
      %p355 = scmp.le.s32.totalorder 1, %s29
      %p356 = scmp.lt.s32.totalorder %s29, 3
      %p357 = pnand %p355, %p356
      %p358 = pneg %p357
      // Predicated region
      $region37: #{tpu_custom_call.1} parent=5 // pred_check
        _
      $region38: #{tpu_custom_call.1} parent=5 // pred_check_branch
        %360 = sbr.rel (%p357) target = $region40
      $region39: #{tpu_custom_call.1} parent=5 // pred_region
        %s361 = ssub.s32 %s29, 1
        %s362 = sand.u32 %s56, 1
        %s363 = scalar_lea.sflag [#allocation3], %s362
        %s364 = sand.u32 %s56, 1
        %s365 = smul.addr %s364, 8
        %s366 = scalar_lea.vmem [#allocation2], %s365
        // Predicated region
        $region41: #{tpu_custom_call.1} parent=39 // pred_check
          %p367 = pneg %p69
        $region42: #{tpu_custom_call.1} parent=39 // pred_check_branch
          %369 = sbr.rel (%p367) target = $region44
        $region43: #{tpu_custom_call.1} parent=39 // pred_region
          %370 = dma.done %s363, 128
        $region44: #{tpu_custom_call.1} parent=39 // pred_fallthru
          _
        // Predicated region
        $region45: #{tpu_custom_call.1} parent=39 // pred_check
          %p371 = pneg %p90
        $region46: #{tpu_custom_call.1} parent=39 // pred_check_branch
          %373 = sbr.rel (%p371) target = $region48
        $region47: #{tpu_custom_call.1} parent=39 // pred_region
          %374 = dma.done [#allocation6], 2048
        $region48: #{tpu_custom_call.1} parent=39 // pred_fallthru
          _
        // Predicated region
        $region49: #{tpu_custom_call.1} parent=39 // pred_check
          %p375 = pneg %p111
        $region50: #{tpu_custom_call.1} parent=39 // pred_check_branch
          %377 = sbr.rel (%p375) target = $region52
        $region51: #{tpu_custom_call.1} parent=39 // pred_region
          %378 = dma.done [#allocation6], 512
        $region52: #{tpu_custom_call.1} parent=39 // pred_fallthru
          _
        // Predicated region
        $region53: #{tpu_custom_call.1} parent=39 // pred_check
          %p379 = pneg %p132
        $region54: #{tpu_custom_call.1} parent=39 // pred_check_branch
          %381 = sbr.rel (%p379) target = $region56
        $region55: #{tpu_custom_call.1} parent=39 // pred_region
          %382 = dma.done [#allocation9], 1024
        $region56: #{tpu_custom_call.1} parent=39 // pred_fallthru
          _
        // Predicated region
        $region57: #{tpu_custom_call.1} parent=39 // pred_check
          %p383 = pneg %p153
        $region58: #{tpu_custom_call.1} parent=39 // pred_check_branch
          %385 = sbr.rel (%p383) target = $region60
        $region59: #{tpu_custom_call.1} parent=39 // pred_region
          %386 = dma.done [#allocation9], 1024
        $region60: #{tpu_custom_call.1} parent=39 // pred_fallthru
          _
        %s387 = sand.u32 %s56, 1
        %s388 = scalar_lea.sflag [#allocation3], %s387
        %s389 = sand.u32 %s56, 1
        %s390 = smul.addr %s389, 8
        %s391 = scalar_lea.vmem [#allocation2], %s390
        %p392 = pneg %p69
        %p393 = pneg %p66
        %p394 = pneg %p90
        %p395 = pneg %p87
        %p396 = pneg %p111
        %p397 = pneg %p108
        %p398 = pneg %p132
        %p399 = pneg %p129
        %p400 = pneg %p153
        %p401 = pneg %p150
        %p402 = pneg %p181
        %p403 = pneg %p178
        %s404 = sand.u32 %s168, 1
        %s405 = scalar_lea.sflag [#allocation4], %s404
        %s406 = sand.u32 %s168, 1
        %s407 = smul.addr %s406, 32
        %s408 = scalar_lea.vmem [#allocation11], %s407
        %p409 = pneg %p209
        %p410 = pneg %p206
        %s411 = sand.u32 %s34, 1
        %s412 = scalar_lea.sflag [#allocation13], %s411
        %s413 = sand.u32 %s196, 1
        %s414 = smul.addr %s413, 32
        %s415 = scalar_lea.vmem [#allocation12], %s414
        %p416 = pneg %p237
        %p417 = pneg %p234
        %s418 = sand.u32 %s34, 1
        %s419 = scalar_lea.sflag [#allocation13], %s418
        %s420 = sand.u32 %s224, 1
        %s421 = smul.addr %s420, 32
        %s422 = scalar_lea.vmem [#allocation14], %s421
        %p423 = pneg %p265
        %p424 = pneg %p262
        %s425 = sand.u32 %s252, 1
        %s426 = scalar_lea.sflag [#allocation16], %s425
        %s427 = sand.u32 %s252, 1
        %s428 = smul.addr %s427, 8
        %s429 = scalar_lea.vmem [#allocation15], %s428
        %v430 = vld [vmem:[%s366] sm:$0xff]
        %v431 = vld [vmem:[#allocation7] sm:$0xff]
        %v432 = vld [vmem:[#allocation7 + $0x8] sm:$0xff]
        %v433 = vld [vmem:[#allocation7 + $0x10] sm:$0xff]
        %v434 = vld [vmem:[#allocation7 + $0x18] sm:$0xff]
        %vm435 = vcmask 261120
        %v437 = vsel %vm435, %v430, 0
        %439 = vmatprep.subr.mxu0 0.0
        %440 = vmatpush1.msra.mxu0 %v431
        %441 = vmatprep.subr.mxu0 0.0
        %442 = vmatpush1.msra.mxu0 %v432
        %443 = vmatprep.subr.mxu0 0.0
        %444 = vmatpush1.msra.mxu0 %v433
        %445 = vmatprep.subr.mxu0 0.0
        %446 = vmatpush1.msra.mxu0 %v434
        %447 = vmatprep.subr.mxu0 0.0
        %448 = vmatpush1.msra.mxu0 0.0
        %449 = vmatprep.subr.mxu0 0.0
        %450 = vmatpush1.msra.mxu0 0.0
        %451 = vmatprep.subr.mxu0 0.0
        %452 = vmatpush1.msra.mxu0 0.0
        %453 = vmatprep.subr.mxu0 0.0
        %454 = vmatpush1.msra.mxu0 0.0
        %455 = vmatprep.subr.mxu0 0.0
        %456 = vmatpush1.msra.mxu0 0.0
        %457 = vmatprep.subr.mxu0 0.0
        %458 = vmatpush1.msra.mxu0 0.0
        %459 = vmatprep.subr.mxu0 0.0
        %460 = vmatpush1.msra.mxu0 0.0
        %461 = vmatprep.subr.mxu0 0.0
        %462 = vmatpush1.msra.mxu0 0.0
        %463 = vmatprep.subr.mxu0 0.0
        %464 = vmatpush1.msra.mxu0 0.0
        %465 = vmatprep.subr.mxu0 0.0
        %466 = vmatpush1.msra.mxu0 0.0
        %467 = vmatprep.subr.mxu0 0.0
        %468 = vmatpush1.msra.mxu0 0.0
        %469 = vmatprep.subr.mxu0 0.0
        %470 = vmatpush1.msra.mxu0 0.0
        %471 = vmatprep.subr.mxu0 0.0
        %472 = vmatpush1.msra.mxu0 0.0
        %473 = vmatprep.subr.mxu0 0.0
        %474 = vmatpush1.msra.mxu0 0.0
        %475 = vmatprep.subr.mxu0 0.0
        %476 = vmatpush1.msra.mxu0 0.0
        %477 = vmatprep.subr.mxu0 0.0
        %478 = vmatpush1.msra.mxu0 0.0
        %479 = vmatprep.subr.mxu0 0.0
        %480 = vmatpush1.msra.mxu0 0.0
        %481 = vmatprep.subr.mxu0 0.0
        %482 = vmatpush1.msra.mxu0 0.0
        %483 = vmatprep.subr.mxu0 0.0
        %484 = vmatpush1.msra.mxu0 0.0
        %485 = vmatprep.subr.mxu0 0.0
        %486 = vmatpush1.msra.mxu0 0.0
        %487 = vmatprep.subr.mxu0 0.0
        %488 = vmatpush1.msra.mxu0 0.0
        %489 = vmatprep.subr.mxu0 0.0
        %490 = vmatpush1.msra.mxu0 0.0
        %491 = vmatprep.subr.mxu0 0.0
        %492 = vmatpush1.msra.mxu0 0.0
        %493 = vmatprep.subr.mxu0 0.0
        %494 = vmatpush1.msra.mxu0 0.0
        %495 = vmatprep.subr.mxu0 0.0
        %496 = vmatpush1.msra.mxu0 0.0
        %497 = vmatprep.subr.mxu0 0.0
        %498 = vmatpush1.msra.mxu0 0.0
        %499 = vmatprep.subr.mxu0 0.0
        %500 = vmatpush1.msra.mxu0 0.0
        %501 = vmatprep.subr.mxu0 0.0
        %502 = vmatpush1.msra.mxu0 0.0
        %503 = vmatprep.mubr.f32.mxu0 0.0
        %504 = vmatmul.mubr.f32.gmra.mrb[0].mxu0 %v437
        %v505 = vpop.f32.mrb[0].mxu0
        %v506 = vadd.f32 0.0, %v505
        %v507 = vpop.f32.mrb[0].mxu0
        %508 = vdwg.mxu0
        %vm509 = vcmask 130048
        %510 = vst.msk [vmem:[%s429] sm:$0xff] %vm509, %v506
        %v511 = vld [vmem:[#allocation5] sm:$0xff]
        %v512 = vld [vmem:[#allocation5 + $0x8] sm:$0xff]
        %v513 = vld [vmem:[#allocation5 + $0x10] sm:$0xff]
        %v514 = vld [vmem:[#allocation5 + $0x18] sm:$0xff]
        %515 = vmatprep.subr.mxu0 0.0
        %516 = vmatpush1.msra.mxu0 %v511
        %517 = vmatprep.subr.mxu0 0.0
        %518 = vmatpush1.msra.mxu0 %v512
        %519 = vmatprep.subr.mxu0 0.0
        %520 = vmatpush1.msra.mxu0 %v513
        %521 = vmatprep.subr.mxu0 0.0
        %522 = vmatpush1.msra.mxu0 %v514
        %523 = vmatprep.subr.mxu0 0.0
        %524 = vmatpush1.msra.mxu0 0.0
        %525 = vmatprep.subr.mxu0 0.0
        %526 = vmatpush1.msra.mxu0 0.0
        %527 = vmatprep.subr.mxu0 0.0
        %528 = vmatpush1.msra.mxu0 0.0
        %529 = vmatprep.subr.mxu0 0.0
        %530 = vmatpush1.msra.mxu0 0.0
        %531 = vmatprep.subr.mxu0 0.0
        %532 = vmatpush1.msra.mxu0 0.0
        %533 = vmatprep.subr.mxu0 0.0
        %534 = vmatpush1.msra.mxu0 0.0
        %535 = vmatprep.subr.mxu0 0.0
        %536 = vmatpush1.msra.mxu0 0.0
        %537 = vmatprep.subr.mxu0 0.0
        %538 = vmatpush1.msra.mxu0 0.0
        %539 = vmatprep.subr.mxu0 0.0
        %540 = vmatpush1.msra.mxu0 0.0
        %541 = vmatprep.subr.mxu0 0.0
        %542 = vmatpush1.msra.mxu0 0.0
        %543 = vmatprep.subr.mxu0 0.0
        %544 = vmatpush1.msra.mxu0 0.0
        %545 = vmatprep.subr.mxu0 0.0
        %546 = vmatpush1.msra.mxu0 0.0
        %547 = vmatprep.subr.mxu0 0.0
        %548 = vmatpush1.msra.mxu0 0.0
        %549 = vmatprep.subr.mxu0 0.0
        %550 = vmatpush1.msra.mxu0 0.0
        %551 = vmatprep.subr.mxu0 0.0
        %552 = vmatpush1.msra.mxu0 0.0
        %553 = vmatprep.subr.mxu0 0.0
        %554 = vmatpush1.msra.mxu0 0.0
        %555 = vmatprep.subr.mxu0 0.0
        %556 = vmatpush1.msra.mxu0 0.0
        %557 = vmatprep.subr.mxu0 0.0
        %558 = vmatpush1.msra.mxu0 0.0
        %559 = vmatprep.subr.mxu0 0.0
        %560 = vmatpush1.msra.mxu0 0.0
        %561 = vmatprep.subr.mxu0 0.0
        %562 = vmatpush1.msra.mxu0 0.0
        %563 = vmatprep.subr.mxu0 0.0
        %564 = vmatpush1.msra.mxu0 0.0
        %565 = vmatprep.subr.mxu0 0.0
        %566 = vmatpush1.msra.mxu0 0.0
        %567 = vmatprep.subr.mxu0 0.0
        %568 = vmatpush1.msra.mxu0 0.0
        %569 = vmatprep.subr.mxu0 0.0
        %570 = vmatpush1.msra.mxu0 0.0
        %571 = vmatprep.subr.mxu0 0.0
        %572 = vmatpush1.msra.mxu0 0.0
        %573 = vmatprep.subr.mxu0 0.0
        %574 = vmatpush1.msra.mxu0 0.0
        %575 = vmatprep.subr.mxu0 0.0
        %576 = vmatpush1.msra.mxu0 0.0
        %577 = vmatprep.subr.mxu0 0.0
        %578 = vmatpush1.msra.mxu0 0.0
        %579 = vmatprep.mubr.f32.mxu0 0.0
        %580 = vmatmul.mubr.f32.gmra.mrb[0].mxu0 %v437
        %v581 = vpop.f32.mrb[0].mxu0
        %v582 = vadd.f32 0.0, %v581
        %v583 = vpop.f32.mrb[0].mxu0
        %584 = vdwg.mxu0
        %v585 = vmul.f32 %v582, 0.17677669
        %vm586 = vcmask 64512
        %587 = vst.msk [vmem:[%s408] sm:$0xff] %vm586, %v585
        %v588 = vld [vmem:[#allocation8] sm:$0xff]
        %v589 = vld [vmem:[#allocation8 + $0x8] sm:$0xff]
        %v591 = vsel %vm509, %v506, 0
        %593 = vmatprep.subr.mxu0 0.0
        %594 = vmatpush1.msra.mxu0 %v588
        %595 = vmatprep.subr.mxu0 0.0
        %596 = vmatpush1.msra.mxu0 %v589
        %597 = vmatprep.subr.mxu0 0.0
        %598 = vmatpush1.msra.mxu0 0.0
        %599 = vmatprep.subr.mxu0 0.0
        %600 = vmatpush1.msra.mxu0 0.0
        %601 = vmatprep.subr.mxu0 0.0
        %602 = vmatpush1.msra.mxu0 0.0
        %603 = vmatprep.subr.mxu0 0.0
        %604 = vmatpush1.msra.mxu0 0.0
        %605 = vmatprep.subr.mxu0 0.0
        %606 = vmatpush1.msra.mxu0 0.0
        %607 = vmatprep.subr.mxu0 0.0
        %608 = vmatpush1.msra.mxu0 0.0
        %609 = vmatprep.subr.mxu0 0.0
        %610 = vmatpush1.msra.mxu0 0.0
        %611 = vmatprep.subr.mxu0 0.0
        %612 = vmatpush1.msra.mxu0 0.0
        %613 = vmatprep.subr.mxu0 0.0
        %614 = vmatpush1.msra.mxu0 0.0
        %615 = vmatprep.subr.mxu0 0.0
        %616 = vmatpush1.msra.mxu0 0.0
        %617 = vmatprep.subr.mxu0 0.0
        %618 = vmatpush1.msra.mxu0 0.0
        %619 = vmatprep.subr.mxu0 0.0
        %620 = vmatpush1.msra.mxu0 0.0
        %621 = vmatprep.subr.mxu0 0.0
        %622 = vmatpush1.msra.mxu0 0.0
        %623 = vmatprep.subr.mxu0 0.0
        %624 = vmatpush1.msra.mxu0 0.0
        %625 = vmatprep.subr.mxu0 0.0
        %626 = vmatpush1.msra.mxu0 0.0
        %627 = vmatprep.subr.mxu0 0.0
        %628 = vmatpush1.msra.mxu0 0.0
        %629 = vmatprep.subr.mxu0 0.0
        %630 = vmatpush1.msra.mxu0 0.0
        %631 = vmatprep.subr.mxu0 0.0
        %632 = vmatpush1.msra.mxu0 0.0
        %633 = vmatprep.subr.mxu0 0.0
        %634 = vmatpush1.msra.mxu0 0.0
        %635 = vmatprep.subr.mxu0 0.0
        %636 = vmatpush1.msra.mxu0 0.0
        %637 = vmatprep.subr.mxu0 0.0
        %638 = vmatpush1.msra.mxu0 0.0
        %639 = vmatprep.subr.mxu0 0.0
        %640 = vmatpush1.msra.mxu0 0.0
        %641 = vmatprep.subr.mxu0 0.0
        %642 = vmatpush1.msra.mxu0 0.0
        %643 = vmatprep.subr.mxu0 0.0
        %644 = vmatpush1.msra.mxu0 0.0
        %645 = vmatprep.subr.mxu0 0.0
        %646 = vmatpush1.msra.mxu0 0.0
        %647 = vmatprep.subr.mxu0 0.0
        %648 = vmatpush1.msra.mxu0 0.0
        %649 = vmatprep.subr.mxu0 0.0
        %650 = vmatpush1.msra.mxu0 0.0
        %651 = vmatprep.subr.mxu0 0.0
        %652 = vmatpush1.msra.mxu0 0.0
        %653 = vmatprep.subr.mxu0 0.0
        %654 = vmatpush1.msra.mxu0 0.0
        %655 = vmatprep.subr.mxu0 0.0
        %656 = vmatpush1.msra.mxu0 0.0
        %657 = vmatprep.mubr.f32.mxu0 0.0
        %658 = vmatmul.mubr.f32.gmra.mrb[0].mxu0 %v591
        %v659 = vpop.f32.mrb[0].mxu0
        %v660 = vadd.f32 0.0, %v659
        %v661 = vpop.f32.mrb[0].mxu0
        %662 = vdwg.mxu0
        %663 = vst.msk [vmem:[%s415] sm:$0xff] %vm586, %v660
        %v664 = vld [vmem:[#allocation10] sm:$0xff]
        %v665 = vld [vmem:[#allocation10 + $0x8] sm:$0xff]
        %666 = vmatprep.subr.mxu0 0.0
        %667 = vmatpush1.msra.mxu0 %v664
        %668 = vmatprep.subr.mxu0 0.0
        %669 = vmatpush1.msra.mxu0 %v665
        %670 = vmatprep.subr.mxu0 0.0
        %671 = vmatpush1.msra.mxu0 0.0
        %672 = vmatprep.subr.mxu0 0.0
        %673 = vmatpush1.msra.mxu0 0.0
        %674 = vmatprep.subr.mxu0 0.0
        %675 = vmatpush1.msra.mxu0 0.0
        %676 = vmatprep.subr.mxu0 0.0
        %677 = vmatpush1.msra.mxu0 0.0
        %678 = vmatprep.subr.mxu0 0.0
        %679 = vmatpush1.msra.mxu0 0.0
        %680 = vmatprep.subr.mxu0 0.0
        %681 = vmatpush1.msra.mxu0 0.0
        %682 = vmatprep.subr.mxu0 0.0
        %683 = vmatpush1.msra.mxu0 0.0
        %684 = vmatprep.subr.mxu0 0.0
        %685 = vmatpush1.msra.mxu0 0.0
        %686 = vmatprep.subr.mxu0 0.0
        %687 = vmatpush1.msra.mxu0 0.0
        %688 = vmatprep.subr.mxu0 0.0
        %689 = vmatpush1.msra.mxu0 0.0
        %690 = vmatprep.subr.mxu0 0.0
        %691 = vmatpush1.msra.mxu0 0.0
        %692 = vmatprep.subr.mxu0 0.0
        %693 = vmatpush1.msra.mxu0 0.0
        %694 = vmatprep.subr.mxu0 0.0
        %695 = vmatpush1.msra.mxu0 0.0
        %696 = vmatprep.subr.mxu0 0.0
        %697 = vmatpush1.msra.mxu0 0.0
        %698 = vmatprep.subr.mxu0 0.0
        %699 = vmatpush1.msra.mxu0 0.0
        %700 = vmatprep.subr.mxu0 0.0
        %701 = vmatpush1.msra.mxu0 0.0
        %702 = vmatprep.subr.mxu0 0.0
        %703 = vmatpush1.msra.mxu0 0.0
        %704 = vmatprep.subr.mxu0 0.0
        %705 = vmatpush1.msra.mxu0 0.0
        %706 = vmatprep.subr.mxu0 0.0
        %707 = vmatpush1.msra.mxu0 0.0
        %708 = vmatprep.subr.mxu0 0.0
        %709 = vmatpush1.msra.mxu0 0.0
        %710 = vmatprep.subr.mxu0 0.0
        %711 = vmatpush1.msra.mxu0 0.0
        %712 = vmatprep.subr.mxu0 0.0
        %713 = vmatpush1.msra.mxu0 0.0
        %714 = vmatprep.subr.mxu0 0.0
        %715 = vmatpush1.msra.mxu0 0.0
        %716 = vmatprep.subr.mxu0 0.0
        %717 = vmatpush1.msra.mxu0 0.0
        %718 = vmatprep.subr.mxu0 0.0
        %719 = vmatpush1.msra.mxu0 0.0
        %720 = vmatprep.subr.mxu0 0.0
        %721 = vmatpush1.msra.mxu0 0.0
        %722 = vmatprep.subr.mxu0 0.0
        %723 = vmatpush1.msra.mxu0 0.0
        %724 = vmatprep.subr.mxu0 0.0
        %725 = vmatpush1.msra.mxu0 0.0
        %726 = vmatprep.subr.mxu0 0.0
        %727 = vmatpush1.msra.mxu0 0.0
        %728 = vmatprep.subr.mxu0 0.0
        %729 = vmatpush1.msra.mxu0 0.0
        %730 = vmatprep.mubr.f32.mxu0 0.0
        %731 = vmatmul.mubr.f32.gmra.mrb[0].mxu0 %v591
        %v732 = vpop.f32.mrb[0].mxu0
        %v733 = vadd.f32 0.0, %v732
        %v734 = vpop.f32.mrb[0].mxu0
        %735 = vdwg.mxu0
        %736 = vst.msk [vmem:[%s422] sm:$0xff] %vm586, %v733
        %s737 = scalar_lea.vmem [#allocation5], 32
        %v738 = vld [vmem:[%s737] sm:$0xff]
        %v739 = vld [vmem:[%s737 + $0x8] sm:$0xff]
        %v740 = vld [vmem:[%s737 + $0x10] sm:$0xff]
        %v741 = vld [vmem:[%s737 + $0x18] sm:$0xff]
        %742 = vmatprep.subr.mxu0 0.0
        %743 = vmatpush1.msra.mxu0 %v738
        %744 = vmatprep.subr.mxu0 0.0
        %745 = vmatpush1.msra.mxu0 %v739
        %746 = vmatprep.subr.mxu0 0.0
        %747 = vmatpush1.msra.mxu0 %v740
        %748 = vmatprep.subr.mxu0 0.0
        %749 = vmatpush1.msra.mxu0 %v741
        %750 = vmatprep.subr.mxu0 0.0
        %751 = vmatpush1.msra.mxu0 0.0
        %752 = vmatprep.subr.mxu0 0.0
        %753 = vmatpush1.msra.mxu0 0.0
        %754 = vmatprep.subr.mxu0 0.0
        %755 = vmatpush1.msra.mxu0 0.0
        %756 = vmatprep.subr.mxu0 0.0
        %757 = vmatpush1.msra.mxu0 0.0
        %758 = vmatprep.subr.mxu0 0.0
        %759 = vmatpush1.msra.mxu0 0.0
        %760 = vmatprep.subr.mxu0 0.0
        %761 = vmatpush1.msra.mxu0 0.0
        %762 = vmatprep.subr.mxu0 0.0
        %763 = vmatpush1.msra.mxu0 0.0
        %764 = vmatprep.subr.mxu0 0.0
        %765 = vmatpush1.msra.mxu0 0.0
        %766 = vmatprep.subr.mxu0 0.0
        %767 = vmatpush1.msra.mxu0 0.0
        %768 = vmatprep.subr.mxu0 0.0
        %769 = vmatpush1.msra.mxu0 0.0
        %770 = vmatprep.subr.mxu0 0.0
        %771 = vmatpush1.msra.mxu0 0.0
        %772 = vmatprep.subr.mxu0 0.0
        %773 = vmatpush1.msra.mxu0 0.0
        %774 = vmatprep.subr.mxu0 0.0
        %775 = vmatpush1.msra.mxu0 0.0
        %776 = vmatprep.subr.mxu0 0.0
        %777 = vmatpush1.msra.mxu0 0.0
        %778 = vmatprep.subr.mxu0 0.0
        %779 = vmatpush1.msra.mxu0 0.0
        %780 = vmatprep.subr.mxu0 0.0
        %781 = vmatpush1.msra.mxu0 0.0
        %782 = vmatprep.subr.mxu0 0.0
        %783 = vmatpush1.msra.mxu0 0.0
        %784 = vmatprep.subr.mxu0 0.0
        %785 = vmatpush1.msra.mxu0 0.0
        %786 = vmatprep.subr.mxu0 0.0
        %787 = vmatpush1.msra.mxu0 0.0
        %788 = vmatprep.subr.mxu0 0.0
        %789 = vmatpush1.msra.mxu0 0.0
        %790 = vmatprep.subr.mxu0 0.0
        %791 = vmatpush1.msra.mxu0 0.0
        %792 = vmatprep.subr.mxu0 0.0
        %793 = vmatpush1.msra.mxu0 0.0
        %794 = vmatprep.subr.mxu0 0.0
        %795 = vmatpush1.msra.mxu0 0.0
        %796 = vmatprep.subr.mxu0 0.0
        %797 = vmatpush1.msra.mxu0 0.0
        %798 = vmatprep.subr.mxu0 0.0
        %799 = vmatpush1.msra.mxu0 0.0
        %800 = vmatprep.subr.mxu0 0.0
        %801 = vmatpush1.msra.mxu0 0.0
        %802 = vmatprep.subr.mxu0 0.0
        %803 = vmatpush1.msra.mxu0 0.0
        %804 = vmatprep.subr.mxu0 0.0
        %805 = vmatpush1.msra.mxu0 0.0
        %806 = vmatprep.mubr.f32.mxu0 0.0
        %807 = vmatmul.mubr.f32.gmra.mrb[0].mxu0 %v437
        %v808 = vpop.f32.mrb[0].mxu0
        %v809 = vadd.f32 0.0, %v808
        %v810 = vpop.f32.mrb[0].mxu0
        %811 = vdwg.mxu0
        %v812 = vmul.f32 %v809, 0.17677669
        %s813 = scalar_lea.vmem %s408, 8 [#allocation11]
        %814 = vst.msk [vmem:[%s813] sm:$0xff] %vm586, %v812
        %s815 = scalar_lea.vmem [#allocation8], 16
        %v816 = vld [vmem:[%s815] sm:$0xff]
        %v817 = vld [vmem:[%s815 + $0x8] sm:$0xff]
        %818 = vmatprep.subr.mxu0 0.0
        %819 = vmatpush1.msra.mxu0 %v816
        %820 = vmatprep.subr.mxu0 0.0
        %821 = vmatpush1.msra.mxu0 %v817
        %822 = vmatprep.subr.mxu0 0.0
        %823 = vmatpush1.msra.mxu0 0.0
        %824 = vmatprep.subr.mxu0 0.0
        %825 = vmatpush1.msra.mxu0 0.0
        %826 = vmatprep.subr.mxu0 0.0
        %827 = vmatpush1.msra.mxu0 0.0
        %828 = vmatprep.subr.mxu0 0.0
        %829 = vmatpush1.msra.mxu0 0.0
        %830 = vmatprep.subr.mxu0 0.0
        %831 = vmatpush1.msra.mxu0 0.0
        %832 = vmatprep.subr.mxu0 0.0
        %833 = vmatpush1.msra.mxu0 0.0
        %834 = vmatprep.subr.mxu0 0.0
        %835 = vmatpush1.msra.mxu0 0.0
        %836 = vmatprep.subr.mxu0 0.0
        %837 = vmatpush1.msra.mxu0 0.0
        %838 = vmatprep.subr.mxu0 0.0
        %839 = vmatpush1.msra.mxu0 0.0
        %840 = vmatprep.subr.mxu0 0.0
        %841 = vmatpush1.msra.mxu0 0.0
        %842 = vmatprep.subr.mxu0 0.0
        %843 = vmatpush1.msra.mxu0 0.0
        %844 = vmatprep.subr.mxu0 0.0
        %845 = vmatpush1.msra.mxu0 0.0
        %846 = vmatprep.subr.mxu0 0.0
        %847 = vmatpush1.msra.mxu0 0.0
        %848 = vmatprep.subr.mxu0 0.0
        %849 = vmatpush1.msra.mxu0 0.0
        %850 = vmatprep.subr.mxu0 0.0
        %851 = vmatpush1.msra.mxu0 0.0
        %852 = vmatprep.subr.mxu0 0.0
        %853 = vmatpush1.msra.mxu0 0.0
        %854 = vmatprep.subr.mxu0 0.0
        %855 = vmatpush1.msra.mxu0 0.0
        %856 = vmatprep.subr.mxu0 0.0
        %857 = vmatpush1.msra.mxu0 0.0
        %858 = vmatprep.subr.mxu0 0.0
        %859 = vmatpush1.msra.mxu0 0.0
        %860 = vmatprep.subr.mxu0 0.0
        %861 = vmatpush1.msra.mxu0 0.0
        %862 = vmatprep.subr.mxu0 0.0
        %863 = vmatpush1.msra.mxu0 0.0
        %864 = vmatprep.subr.mxu0 0.0
        %865 = vmatpush1.msra.mxu0 0.0
        %866 = vmatprep.subr.mxu0 0.0
        %867 = vmatpush1.msra.mxu0 0.0
        %868 = vmatprep.subr.mxu0 0.0
        %869 = vmatpush1.msra.mxu0 0.0
        %870 = vmatprep.subr.mxu0 0.0
        %871 = vmatpush1.msra.mxu0 0.0
        %872 = vmatprep.subr.mxu0 0.0
        %873 = vmatpush1.msra.mxu0 0.0
        %874 = vmatprep.subr.mxu0 0.0
        %875 = vmatpush1.msra.mxu0 0.0
        %876 = vmatprep.subr.mxu0 0.0
        %877 = vmatpush1.msra.mxu0 0.0
        %878 = vmatprep.subr.mxu0 0.0
        %879 = vmatpush1.msra.mxu0 0.0
        %880 = vmatprep.subr.mxu0 0.0
        %881 = vmatpush1.msra.mxu0 0.0
        %882 = vmatprep.mubr.f32.mxu0 0.0
        %883 = vmatmul.mubr.f32.gmra.mrb[0].mxu0 %v591
        %v884 = vpop.f32.mrb[0].mxu0
        %v885 = vadd.f32 0.0, %v884
        %v886 = vpop.f32.mrb[0].mxu0
        %887 = vdwg.mxu0
        %s888 = scalar_lea.vmem %s415, 8 [#allocation12]
        %889 = vst.msk [vmem:[%s888] sm:$0xff] %vm586, %v885
        %s890 = scalar_lea.vmem [#allocation10], 16
        %v891 = vld [vmem:[%s890] sm:$0xff]
        %v892 = vld [vmem:[%s890 + $0x8] sm:$0xff]
        %893 = vmatprep.subr.mxu0 0.0
        %894 = vmatpush1.msra.mxu0 %v891
        %895 = vmatprep.subr.mxu0 0.0
        %896 = vmatpush1.msra.mxu0 %v892
        %897 = vmatprep.subr.mxu0 0.0
        %898 = vmatpush1.msra.mxu0 0.0
        %899 = vmatprep.subr.mxu0 0.0
        %900 = vmatpush1.msra.mxu0 0.0
        %901 = vmatprep.subr.mxu0 0.0
        %902 = vmatpush1.msra.mxu0 0.0
        %903 = vmatprep.subr.mxu0 0.0
        %904 = vmatpush1.msra.mxu0 0.0
        %905 = vmatprep.subr.mxu0 0.0
        %906 = vmatpush1.msra.mxu0 0.0
        %907 = vmatprep.subr.mxu0 0.0
        %908 = vmatpush1.msra.mxu0 0.0
        %909 = vmatprep.subr.mxu0 0.0
        %910 = vmatpush1.msra.mxu0 0.0
        %911 = vmatprep.subr.mxu0 0.0
        %912 = vmatpush1.msra.mxu0 0.0
        %913 = vmatprep.subr.mxu0 0.0
        %914 = vmatpush1.msra.mxu0 0.0
        %915 = vmatprep.subr.mxu0 0.0
        %916 = vmatpush1.msra.mxu0 0.0
        %917 = vmatprep.subr.mxu0 0.0
        %918 = vmatpush1.msra.mxu0 0.0
        %919 = vmatprep.subr.mxu0 0.0
        %920 = vmatpush1.msra.mxu0 0.0
        %921 = vmatprep.subr.mxu0 0.0
        %922 = vmatpush1.msra.mxu0 0.0
        %923 = vmatprep.subr.mxu0 0.0
        %924 = vmatpush1.msra.mxu0 0.0
        %925 = vmatprep.subr.mxu0 0.0
        %926 = vmatpush1.msra.mxu0 0.0
        %927 = vmatprep.subr.mxu0 0.0
        %928 = vmatpush1.msra.mxu0 0.0
        %929 = vmatprep.subr.mxu0 0.0
        %930 = vmatpush1.msra.mxu0 0.0
        %931 = vmatprep.subr.mxu0 0.0
        %932 = vmatpush1.msra.mxu0 0.0
        %933 = vmatprep.subr.mxu0 0.0
        %934 = vmatpush1.msra.mxu0 0.0
        %935 = vmatprep.subr.mxu0 0.0
        %936 = vmatpush1.msra.mxu0 0.0
        %937 = vmatprep.subr.mxu0 0.0
        %938 = vmatpush1.msra.mxu0 0.0
        %939 = vmatprep.subr.mxu0 0.0
        %940 = vmatpush1.msra.mxu0 0.0
        %941 = vmatprep.subr.mxu0 0.0
        %942 = vmatpush1.msra.mxu0 0.0
        %943 = vmatprep.subr.mxu0 0.0
        %944 = vmatpush1.msra.mxu0 0.0
        %945 = vmatprep.subr.mxu0 0.0
        %946 = vmatpush1.msra.mxu0 0.0
        %947 = vmatprep.subr.mxu0 0.0
        %948 = vmatpush1.msra.mxu0 0.0
        %949 = vmatprep.subr.mxu0 0.0
        %950 = vmatpush1.msra.mxu0 0.0
        %951 = vmatprep.subr.mxu0 0.0
        %952 = vmatpush1.msra.mxu0 0.0
        %953 = vmatprep.subr.mxu0 0.0
        %954 = vmatpush1.msra.mxu0 0.0
        %955 = vmatprep.subr.mxu0 0.0
        %956 = vmatpush1.msra.mxu0 0.0
        %957 = vmatprep.mubr.f32.mxu0 0.0
        %958 = vmatmul.mubr.f32.gmra.mrb[0].mxu0 %v591
        %v959 = vpop.f32.mrb[0].mxu0
        %v960 = vadd.f32 0.0, %v959
        %v961 = vpop.f32.mrb[0].mxu0
        %962 = vdwg.mxu0
        %s963 = scalar_lea.vmem %s422, 8 [#allocation14]
        %964 = vst.msk [vmem:[%s963] sm:$0xff] %vm586, %v960
        %s965 = scalar_lea.vmem [#allocation5], 64
        %v966 = vld [vmem:[%s965] sm:$0xff]
        %v967 = vld [vmem:[%s965 + $0x8] sm:$0xff]
        %v968 = vld [vmem:[%s965 + $0x10] sm:$0xff]
        %v969 = vld [vmem:[%s965 + $0x18] sm:$0xff]
        %970 = vmatprep.subr.mxu0 0.0
        %971 = vmatpush1.msra.mxu0 %v966
        %972 = vmatprep.subr.mxu0 0.0
        %973 = vmatpush1.msra.mxu0 %v967
        %974 = vmatprep.subr.mxu0 0.0
        %975 = vmatpush1.msra.mxu0 %v968
        %976 = vmatprep.subr.mxu0 0.0
        %977 = vmatpush1.msra.mxu0 %v969
        %978 = vmatprep.subr.mxu0 0.0
        %979 = vmatpush1.msra.mxu0 0.0
        %980 = vmatprep.subr.mxu0 0.0
        %981 = vmatpush1.msra.mxu0 0.0
        %982 = vmatprep.subr.mxu0 0.0
        %983 = vmatpush1.msra.mxu0 0.0
        %984 = vmatprep.subr.mxu0 0.0
        %985 = vmatpush1.msra.mxu0 0.0
        %986 = vmatprep.subr.mxu0 0.0
        %987 = vmatpush1.msra.mxu0 0.0
        %988 = vmatprep.subr.mxu0 0.0
        %989 = vmatpush1.msra.mxu0 0.0
        %990 = vmatprep.subr.mxu0 0.0
        %991 = vmatpush1.msra.mxu0 0.0
        %992 = vmatprep.subr.mxu0 0.0
        %993 = vmatpush1.msra.mxu0 0.0
        %994 = vmatprep.subr.mxu0 0.0
        %995 = vmatpush1.msra.mxu0 0.0
        %996 = vmatprep.subr.mxu0 0.0
        %997 = vmatpush1.msra.mxu0 0.0
        %998 = vmatprep.subr.mxu0 0.0
        %999 = vmatpush1.msra.mxu0 0.0
        %1000 = vmatprep.subr.mxu0 0.0
        %1001 = vmatpush1.msra.mxu0 0.0
        %1002 = vmatprep.subr.mxu0 0.0
        %1003 = vmatpush1.msra.mxu0 0.0
        %1004 = vmatprep.subr.mxu0 0.0
        %1005 = vmatpush1.msra.mxu0 0.0
        %1006 = vmatprep.subr.mxu0 0.0
        %1007 = vmatpush1.msra.mxu0 0.0
        %1008 = vmatprep.subr.mxu0 0.0
        %1009 = vmatpush1.msra.mxu0 0.0
        %1010 = vmatprep.subr.mxu0 0.0
        %1011 = vmatpush1.msra.mxu0 0.0
        %1012 = vmatprep.subr.mxu0 0.0
        %1013 = vmatpush1.msra.mxu0 0.0
        %1014 = vmatprep.subr.mxu0 0.0
        %1015 = vmatpush1.msra.mxu0 0.0
        %1016 = vmatprep.subr.mxu0 0.0
        %1017 = vmatpush1.msra.mxu0 0.0
        %1018 = vmatprep.subr.mxu0 0.0
        %1019 = vmatpush1.msra.mxu0 0.0
        %1020 = vmatprep.subr.mxu0 0.0
        %1021 = vmatpush1.msra.mxu0 0.0
        %1022 = vmatprep.subr.mxu0 0.0
        %1023 = vmatpush1.msra.mxu0 0.0
        %1024 = vmatprep.subr.mxu0 0.0
        %1025 = vmatpush1.msra.mxu0 0.0
        %1026 = vmatprep.subr.mxu0 0.0
        %1027 = vmatpush1.msra.mxu0 0.0
        %1028 = vmatprep.subr.mxu0 0.0
        %1029 = vmatpush1.msra.mxu0 0.0
        %1030 = vmatprep.subr.mxu0 0.0
        %1031 = vmatpush1.msra.mxu0 0.0
        %1032 = vmatprep.subr.mxu0 0.0
        %1033 = vmatpush1.msra.mxu0 0.0
        %1034 = vmatprep.mubr.f32.mxu0 0.0
        %1035 = vmatmul.mubr.f32.gmra.mrb[0].mxu0 %v437
        %v1036 = vpop.f32.mrb[0].mxu0
        %v1037 = vadd.f32 0.0, %v1036
        %v1038 = vpop.f32.mrb[0].mxu0
        %1039 = vdwg.mxu0
        %v1040 = vmul.f32 %v1037, 0.17677669
        %s1041 = scalar_lea.vmem %s408, 16 [#allocation11]
        %1042 = vst.msk [vmem:[%s1041] sm:$0xff] %vm586, %v1040
        %s1043 = scalar_lea.vmem [#allocation8], 32
        %v1044 = vld [vmem:[%s1043] sm:$0xff]
        %v1045 = vld [vmem:[%s1043 + $0x8] sm:$0xff]
        %1046 = vmatprep.subr.mxu0 0.0
        %1047 = vmatpush1.msra.mxu0 %v1044
        %1048 = vmatprep.subr.mxu0 0.0
        %1049 = vmatpush1.msra.mxu0 %v1045
        %1050 = vmatprep.subr.mxu0 0.0
        %1051 = vmatpush1.msra.mxu0 0.0
        %1052 = vmatprep.subr.mxu0 0.0
        %1053 = vmatpush1.msra.mxu0 0.0
        %1054 = vmatprep.subr.mxu0 0.0
        %1055 = vmatpush1.msra.mxu0 0.0
        %1056 = vmatprep.subr.mxu0 0.0
        %1057 = vmatpush1.msra.mxu0 0.0
        %1058 = vmatprep.subr.mxu0 0.0
        %1059 = vmatpush1.msra.mxu0 0.0
        %1060 = vmatprep.subr.mxu0 0.0
        %1061 = vmatpush1.msra.mxu0 0.0
        %1062 = vmatprep.subr.mxu0 0.0
        %1063 = vmatpush1.msra.mxu0 0.0
        %1064 = vmatprep.subr.mxu0 0.0
        %1065 = vmatpush1.msra.mxu0 0.0
        %1066 = vmatprep.subr.mxu0 0.0
        %1067 = vmatpush1.msra.mxu0 0.0
        %1068 = vmatprep.subr.mxu0 0.0
        %1069 = vmatpush1.msra.mxu0 0.0
        %1070 = vmatprep.subr.mxu0 0.0
        %1071 = vmatpush1.msra.mxu0 0.0
        %1072 = vmatprep.subr.mxu0 0.0
        %1073 = vmatpush1.msra.mxu0 0.0
        %1074 = vmatprep.subr.mxu0 0.0
        %1075 = vmatpush1.msra.mxu0 0.0
        %1076 = vmatprep.subr.mxu0 0.0
        %1077 = vmatpush1.msra.mxu0 0.0
        %1078 = vmatprep.subr.mxu0 0.0
        %1079 = vmatpush1.msra.mxu0 0.0
        %1080 = vmatprep.subr.mxu0 0.0
        %1081 = vmatpush1.msra.mxu0 0.0
        %1082 = vmatprep.subr.mxu0 0.0
        %1083 = vmatpush1.msra.mxu0 0.0
        %1084 = vmatprep.subr.mxu0 0.0
        %1085 = vmatpush1.msra.mxu0 0.0
        %1086 = vmatprep.subr.mxu0 0.0
        %1087 = vmatpush1.msra.mxu0 0.0
        %1088 = vmatprep.subr.mxu0 0.0
        %1089 = vmatpush1.msra.mxu0 0.0
        %1090 = vmatprep.subr.mxu0 0.0
        %1091 = vmatpush1.msra.mxu0 0.0
        %1092 = vmatprep.subr.mxu0 0.0
        %1093 = vmatpush1.msra.mxu0 0.0
        %1094 = vmatprep.subr.mxu0 0.0
        %1095 = vmatpush1.msra.mxu0 0.0
        %1096 = vmatprep.subr.mxu0 0.0
        %1097 = vmatpush1.msra.mxu0 0.0
        %1098 = vmatprep.subr.mxu0 0.0
        %1099 = vmatpush1.msra.mxu0 0.0
        %1100 = vmatprep.subr.mxu0 0.0
        %1101 = vmatpush1.msra.mxu0 0.0
        %1102 = vmatprep.subr.mxu0 0.0
        %1103 = vmatpush1.msra.mxu0 0.0
        %1104 = vmatprep.subr.mxu0 0.0
        %1105 = vmatpush1.msra.mxu0 0.0
        %1106 = vmatprep.subr.mxu0 0.0
        %1107 = vmatpush1.msra.mxu0 0.0
        %1108 = vmatprep.subr.mxu0 0.0
        %1109 = vmatpush1.msra.mxu0 0.0
        %1110 = vmatprep.mubr.f32.mxu0 0.0
        %1111 = vmatmul.mubr.f32.gmra.mrb[0].mxu0 %v591
        %v1112 = vpop.f32.mrb[0].mxu0
        %v1113 = vadd.f32 0.0, %v1112
        %v1114 = vpop.f32.mrb[0].mxu0
        %1115 = vdwg.mxu0
        %s1116 = scalar_lea.vmem %s415, 16 [#allocation12]
        %1117 = vst.msk [vmem:[%s1116] sm:$0xff] %vm586, %v1113
        %s1118 = scalar_lea.vmem [#allocation10], 32
        %v1119 = vld [vmem:[%s1118] sm:$0xff]
        %v1120 = vld [vmem:[%s1118 + $0x8] sm:$0xff]
        %1121 = vmatprep.subr.mxu0 0.0
        %1122 = vmatpush1.msra.mxu0 %v1119
        %1123 = vmatprep.subr.mxu0 0.0
        %1124 = vmatpush1.msra.mxu0 %v1120
        %1125 = vmatprep.subr.mxu0 0.0
        %1126 = vmatpush1.msra.mxu0 0.0
        %1127 = vmatprep.subr.mxu0 0.0
        %1128 = vmatpush1.msra.mxu0 0.0
        %1129 = vmatprep.subr.mxu0 0.0
        %1130 = vmatpush1.msra.mxu0 0.0
        %1131 = vmatprep.subr.mxu0 0.0
        %1132 = vmatpush1.msra.mxu0 0.0
        %1133 = vmatprep.subr.mxu0 0.0
        %1134 = vmatpush1.msra.mxu0 0.0
        %1135 = vmatprep.subr.mxu0 0.0
        %1136 = vmatpush1.msra.mxu0 0.0
        %1137 = vmatprep.subr.mxu0 0.0
        %1138 = vmatpush1.msra.mxu0 0.0
        %1139 = vmatprep.subr.mxu0 0.0
        %1140 = vmatpush1.msra.mxu0 0.0
        %1141 = vmatprep.subr.mxu0 0.0
        %1142 = vmatpush1.msra.mxu0 0.0
        %1143 = vmatprep.subr.mxu0 0.0
        %1144 = vmatpush1.msra.mxu0 0.0
        %1145 = vmatprep.subr.mxu0 0.0
        %1146 = vmatpush1.msra.mxu0 0.0
        %1147 = vmatprep.subr.mxu0 0.0
        %1148 = vmatpush1.msra.mxu0 0.0
        %1149 = vmatprep.subr.mxu0 0.0
        %1150 = vmatpush1.msra.mxu0 0.0
        %1151 = vmatprep.subr.mxu0 0.0
        %1152 = vmatpush1.msra.mxu0 0.0
        %1153 = vmatprep.subr.mxu0 0.0
        %1154 = vmatpush1.msra.mxu0 0.0
        %1155 = vmatprep.subr.mxu0 0.0
        %1156 = vmatpush1.msra.mxu0 0.0
        %1157 = vmatprep.subr.mxu0 0.0
        %1158 = vmatpush1.msra.mxu0 0.0
        %1159 = vmatprep.subr.mxu0 0.0
        %1160 = vmatpush1.msra.mxu0 0.0
        %1161 = vmatprep.subr.mxu0 0.0
        %1162 = vmatpush1.msra.mxu0 0.0
        %1163 = vmatprep.subr.mxu0 0.0
        %1164 = vmatpush1.msra.mxu0 0.0
        %1165 = vmatprep.subr.mxu0 0.0
        %1166 = vmatpush1.msra.mxu0 0.0
        %1167 = vmatprep.subr.mxu0 0.0
        %1168 = vmatpush1.msra.mxu0 0.0
        %1169 = vmatprep.subr.mxu0 0.0
        %1170 = vmatpush1.msra.mxu0 0.0
        %1171 = vmatprep.subr.mxu0 0.0
        %1172 = vmatpush1.msra.mxu0 0.0
        %1173 = vmatprep.subr.mxu0 0.0
        %1174 = vmatpush1.msra.mxu0 0.0
        %1175 = vmatprep.subr.mxu0 0.0
        %1176 = vmatpush1.msra.mxu0 0.0
        %1177 = vmatprep.subr.mxu0 0.0
        %1178 = vmatpush1.msra.mxu0 0.0
        %1179 = vmatprep.subr.mxu0 0.0
        %1180 = vmatpush1.msra.mxu0 0.0
        %1181 = vmatprep.subr.mxu0 0.0
        %1182 = vmatpush1.msra.mxu0 0.0
        %1183 = vmatprep.subr.mxu0 0.0
        %1184 = vmatpush1.msra.mxu0 0.0
        %1185 = vmatprep.mubr.f32.mxu0 0.0
        %1186 = vmatmul.mubr.f32.gmra.mrb[0].mxu0 %v591
        %v1187 = vpop.f32.mrb[0].mxu0
        %v1188 = vadd.f32 0.0, %v1187
        %v1189 = vpop.f32.mrb[0].mxu0
        %1190 = vdwg.mxu0
        %s1191 = scalar_lea.vmem %s422, 16 [#allocation14]
        %1192 = vst.msk [vmem:[%s1191] sm:$0xff] %vm586, %v1188
        %s1193 = scalar_lea.vmem [#allocation5], 96
        %v1194 = vld [vmem:[%s1193] sm:$0xff]
        %v1195 = vld [vmem:[%s1193 + $0x8] sm:$0xff]
        %v1196 = vld [vmem:[%s1193 + $0x10] sm:$0xff]
        %v1197 = vld [vmem:[%s1193 + $0x18] sm:$0xff]
        %1198 = vmatprep.subr.mxu0 0.0
        %1199 = vmatpush1.msra.mxu0 %v1194
        %1200 = vmatprep.subr.mxu0 0.0
        %1201 = vmatpush1.msra.mxu0 %v1195
        %1202 = vmatprep.subr.mxu0 0.0
        %1203 = vmatpush1.msra.mxu0 %v1196
        %1204 = vmatprep.subr.mxu0 0.0
        %1205 = vmatpush1.msra.mxu0 %v1197
        %1206 = vmatprep.subr.mxu0 0.0
        %1207 = vmatpush1.msra.mxu0 0.0
        %1208 = vmatprep.subr.mxu0 0.0
        %1209 = vmatpush1.msra.mxu0 0.0
        %1210 = vmatprep.subr.mxu0 0.0
        %1211 = vmatpush1.msra.mxu0 0.0
        %1212 = vmatprep.subr.mxu0 0.0
        %1213 = vmatpush1.msra.mxu0 0.0
        %1214 = vmatprep.subr.mxu0 0.0
        %1215 = vmatpush1.msra.mxu0 0.0
        %1216 = vmatprep.subr.mxu0 0.0
        %1217 = vmatpush1.msra.mxu0 0.0
        %1218 = vmatprep.subr.mxu0 0.0
        %1219 = vmatpush1.msra.mxu0 0.0
        %1220 = vmatprep.subr.mxu0 0.0
        %1221 = vmatpush1.msra.mxu0 0.0
        %1222 = vmatprep.subr.mxu0 0.0
        %1223 = vmatpush1.msra.mxu0 0.0
        %1224 = vmatprep.subr.mxu0 0.0
        %1225 = vmatpush1.msra.mxu0 0.0
        %1226 = vmatprep.subr.mxu0 0.0
        %1227 = vmatpush1.msra.mxu0 0.0
        %1228 = vmatprep.subr.mxu0 0.0
        %1229 = vmatpush1.msra.mxu0 0.0
        %1230 = vmatprep.subr.mxu0 0.0
        %1231 = vmatpush1.msra.mxu0 0.0
        %1232 = vmatprep.subr.mxu0 0.0
        %1233 = vmatpush1.msra.mxu0 0.0
        %1234 = vmatprep.subr.mxu0 0.0
        %1235 = vmatpush1.msra.mxu0 0.0
        %1236 = vmatprep.subr.mxu0 0.0
        %1237 = vmatpush1.msra.mxu0 0.0
        %1238 = vmatprep.subr.mxu0 0.0
        %1239 = vmatpush1.msra.mxu0 0.0
        %1240 = vmatprep.subr.mxu0 0.0
        %1241 = vmatpush1.msra.mxu0 0.0
        %1242 = vmatprep.subr.mxu0 0.0
        %1243 = vmatpush1.msra.mxu0 0.0
        %1244 = vmatprep.subr.mxu0 0.0
        %1245 = vmatpush1.msra.mxu0 0.0
        %1246 = vmatprep.subr.mxu0 0.0
        %1247 = vmatpush1.msra.mxu0 0.0
        %1248 = vmatprep.subr.mxu0 0.0
        %1249 = vmatpush1.msra.mxu0 0.0
        %1250 = vmatprep.subr.mxu0 0.0
        %1251 = vmatpush1.msra.mxu0 0.0
        %1252 = vmatprep.subr.mxu0 0.0
        %1253 = vmatpush1.msra.mxu0 0.0
        %1254 = vmatprep.subr.mxu0 0.0
        %1255 = vmatpush1.msra.mxu0 0.0
        %1256 = vmatprep.subr.mxu0 0.0
        %1257 = vmatpush1.msra.mxu0 0.0
        %1258 = vmatprep.subr.mxu0 0.0
        %1259 = vmatpush1.msra.mxu0 0.0
        %1260 = vmatprep.subr.mxu0 0.0
        %1261 = vmatpush1.msra.mxu0 0.0
        %1262 = vmatprep.mubr.f32.mxu0 0.0
        %1263 = vmatmul.mubr.f32.gmra.mrb[0].mxu0 %v437
        %v1264 = vpop.f32.mrb[0].mxu0
        %v1265 = vadd.f32 0.0, %v1264
        %v1266 = vpop.f32.mrb[0].mxu0
        %1267 = vdwg.mxu0
        %v1268 = vmul.f32 %v1265, 0.17677669
        %s1269 = scalar_lea.vmem %s408, 24 [#allocation11]
        %1270 = vst.msk [vmem:[%s1269] sm:$0xff] %vm586, %v1268
        %s1271 = scalar_lea.vmem [#allocation8], 48
        %v1272 = vld [vmem:[%s1271] sm:$0xff]
        %v1273 = vld [vmem:[%s1271 + $0x8] sm:$0xff]
        %1274 = vmatprep.subr.mxu0 0.0
        %1275 = vmatpush1.msra.mxu0 %v1272
        %1276 = vmatprep.subr.mxu0 0.0
        %1277 = vmatpush1.msra.mxu0 %v1273
        %1278 = vmatprep.subr.mxu0 0.0
        %1279 = vmatpush1.msra.mxu0 0.0
        %1280 = vmatprep.subr.mxu0 0.0
        %1281 = vmatpush1.msra.mxu0 0.0
        %1282 = vmatprep.subr.mxu0 0.0
        %1283 = vmatpush1.msra.mxu0 0.0
        %1284 = vmatprep.subr.mxu0 0.0
        %1285 = vmatpush1.msra.mxu0 0.0
        %1286 = vmatprep.subr.mxu0 0.0
        %1287 = vmatpush1.msra.mxu0 0.0
        %1288 = vmatprep.subr.mxu0 0.0
        %1289 = vmatpush1.msra.mxu0 0.0
        %1290 = vmatprep.subr.mxu0 0.0
        %1291 = vmatpush1.msra.mxu0 0.0
        %1292 = vmatprep.subr.mxu0 0.0
        %1293 = vmatpush1.msra.mxu0 0.0
        %1294 = vmatprep.subr.mxu0 0.0
        %1295 = vmatpush1.msra.mxu0 0.0
        %1296 = vmatprep.subr.mxu0 0.0
        %1297 = vmatpush1.msra.mxu0 0.0
        %1298 = vmatprep.subr.mxu0 0.0
        %1299 = vmatpush1.msra.mxu0 0.0
        %1300 = vmatprep.subr.mxu0 0.0
        %1301 = vmatpush1.msra.mxu0 0.0
        %1302 = vmatprep.subr.mxu0 0.0
        %1303 = vmatpush1.msra.mxu0 0.0
        %1304 = vmatprep.subr.mxu0 0.0
        %1305 = vmatpush1.msra.mxu0 0.0
        %1306 = vmatprep.subr.mxu0 0.0
        %1307 = vmatpush1.msra.mxu0 0.0
        %1308 = vmatprep.subr.mxu0 0.0
        %1309 = vmatpush1.msra.mxu0 0.0
        %1310 = vmatprep.subr.mxu0 0.0
        %1311 = vmatpush1.msra.mxu0 0.0
        %1312 = vmatprep.subr.mxu0 0.0
        %1313 = vmatpush1.msra.mxu0 0.0
        %1314 = vmatprep.subr.mxu0 0.0
        %1315 = vmatpush1.msra.mxu0 0.0
        %1316 = vmatprep.subr.mxu0 0.0
        %1317 = vmatpush1.msra.mxu0 0.0
        %1318 = vmatprep.subr.mxu0 0.0
        %1319 = vmatpush1.msra.mxu0 0.0
        %1320 = vmatprep.subr.mxu0 0.0
        %1321 = vmatpush1.msra.mxu0 0.0
        %1322 = vmatprep.subr.mxu0 0.0
        %1323 = vmatpush1.msra.mxu0 0.0
        %1324 = vmatprep.subr.mxu0 0.0
        %1325 = vmatpush1.msra.mxu0 0.0
        %1326 = vmatprep.subr.mxu0 0.0
        %1327 = vmatpush1.msra.mxu0 0.0
        %1328 = vmatprep.subr.mxu0 0.0
        %1329 = vmatpush1.msra.mxu0 0.0
        %1330 = vmatprep.subr.mxu0 0.0
        %1331 = vmatpush1.msra.mxu0 0.0
        %1332 = vmatprep.subr.mxu0 0.0
        %1333 = vmatpush1.msra.mxu0 0.0
        %1334 = vmatprep.subr.mxu0 0.0
        %1335 = vmatpush1.msra.mxu0 0.0
        %1336 = vmatprep.subr.mxu0 0.0
        %1337 = vmatpush1.msra.mxu0 0.0
        %1338 = vmatprep.mubr.f32.mxu0 0.0
        %1339 = vmatmul.mubr.f32.gmra.mrb[0].mxu0 %v591
        %v1340 = vpop.f32.mrb[0].mxu0
        %v1341 = vadd.f32 0.0, %v1340
        %v1342 = vpop.f32.mrb[0].mxu0
        %1343 = vdwg.mxu0
        %s1344 = scalar_lea.vmem %s415, 24 [#allocation12]
        %1345 = vst.msk [vmem:[%s1344] sm:$0xff] %vm586, %v1341
        %s1346 = scalar_lea.vmem [#allocation10], 48
        %v1347 = vld [vmem:[%s1346] sm:$0xff]
        %v1348 = vld [vmem:[%s1346 + $0x8] sm:$0xff]
        %1349 = vmatprep.subr.mxu0 0.0
        %1350 = vmatpush1.msra.mxu0 %v1347
        %1351 = vmatprep.subr.mxu0 0.0
        %1352 = vmatpush1.msra.mxu0 %v1348
        %1353 = vmatprep.subr.mxu0 0.0
        %1354 = vmatpush1.msra.mxu0 0.0
        %1355 = vmatprep.subr.mxu0 0.0
        %1356 = vmatpush1.msra.mxu0 0.0
        %1357 = vmatprep.subr.mxu0 0.0
        %1358 = vmatpush1.msra.mxu0 0.0
        %1359 = vmatprep.subr.mxu0 0.0
        %1360 = vmatpush1.msra.mxu0 0.0
        %1361 = vmatprep.subr.mxu0 0.0
        %1362 = vmatpush1.msra.mxu0 0.0
        %1363 = vmatprep.subr.mxu0 0.0
        %1364 = vmatpush1.msra.mxu0 0.0
        %1365 = vmatprep.subr.mxu0 0.0
        %1366 = vmatpush1.msra.mxu0 0.0
        %1367 = vmatprep.subr.mxu0 0.0
        %1368 = vmatpush1.msra.mxu0 0.0
        %1369 = vmatprep.subr.mxu0 0.0
        %1370 = vmatpush1.msra.mxu0 0.0
        %1371 = vmatprep.subr.mxu0 0.0
        %1372 = vmatpush1.msra.mxu0 0.0
        %1373 = vmatprep.subr.mxu0 0.0
        %1374 = vmatpush1.msra.mxu0 0.0
        %1375 = vmatprep.subr.mxu0 0.0
        %1376 = vmatpush1.msra.mxu0 0.0
        %1377 = vmatprep.subr.mxu0 0.0
        %1378 = vmatpush1.msra.mxu0 0.0
        %1379 = vmatprep.subr.mxu0 0.0
        %1380 = vmatpush1.msra.mxu0 0.0
        %1381 = vmatprep.subr.mxu0 0.0
        %1382 = vmatpush1.msra.mxu0 0.0
        %1383 = vmatprep.subr.mxu0 0.0
        %1384 = vmatpush1.msra.mxu0 0.0
        %1385 = vmatprep.subr.mxu0 0.0
        %1386 = vmatpush1.msra.mxu0 0.0
        %1387 = vmatprep.subr.mxu0 0.0
        %1388 = vmatpush1.msra.mxu0 0.0
        %1389 = vmatprep.subr.mxu0 0.0
        %1390 = vmatpush1.msra.mxu0 0.0
        %1391 = vmatprep.subr.mxu0 0.0
        %1392 = vmatpush1.msra.mxu0 0.0
        %1393 = vmatprep.subr.mxu0 0.0
        %1394 = vmatpush1.msra.mxu0 0.0
        %1395 = vmatprep.subr.mxu0 0.0
        %1396 = vmatpush1.msra.mxu0 0.0
        %1397 = vmatprep.subr.mxu0 0.0
        %1398 = vmatpush1.msra.mxu0 0.0
        %1399 = vmatprep.subr.mxu0 0.0
        %1400 = vmatpush1.msra.mxu0 0.0
        %1401 = vmatprep.subr.mxu0 0.0
        %1402 = vmatpush1.msra.mxu0 0.0
        %1403 = vmatprep.subr.mxu0 0.0
        %1404 = vmatpush1.msra.mxu0 0.0
        %1405 = vmatprep.subr.mxu0 0.0
        %1406 = vmatpush1.msra.mxu0 0.0
        %1407 = vmatprep.subr.mxu0 0.0
        %1408 = vmatpush1.msra.mxu0 0.0
        %1409 = vmatprep.subr.mxu0 0.0
        %1410 = vmatpush1.msra.mxu0 0.0
        %1411 = vmatprep.subr.mxu0 0.0
        %1412 = vmatpush1.msra.mxu0 0.0
        %1413 = vmatprep.mubr.f32.mxu0 0.0
        %1414 = vmatmul.mubr.f32.gmra.mrb[0].mxu0 %v591
        %v1415 = vpop.f32.mrb[0].mxu0
        %v1416 = vadd.f32 0.0, %v1415
        %v1417 = vpop.f32.mrb[0].mxu0
        %1418 = vdwg.mxu0
        %s1419 = scalar_lea.vmem %s422, 24 [#allocation14]
        %1420 = vst.msk [vmem:[%s1419] sm:$0xff] %vm586, %v1416
        %s1421 = sand.u32 %s168, 1
        %s1422 = scalar_lea.sflag [#allocation4], %s1421
        %s1423 = sand.u32 %s168, 1
        %s1424 = smul.addr %s1423, 32
        %s1425 = scalar_lea.vmem [#allocation11], %s1424
        %s1426 = sand.u32 %s34, 1
        %s1427 = scalar_lea.sflag [#allocation13], %s1426
        %s1428 = sand.u32 %s196, 1
        %s1429 = smul.addr %s1428, 32
        %s1430 = scalar_lea.vmem [#allocation12], %s1429
        %s1431 = sand.u32 %s34, 1
        %s1432 = scalar_lea.sflag [#allocation13], %s1431
        %s1433 = sand.u32 %s224, 1
        %s1434 = smul.addr %s1433, 32
        %s1435 = scalar_lea.vmem [#allocation14], %s1434
        %s1436 = sand.u32 %s252, 1
        %s1437 = scalar_lea.sflag [#allocation16], %s1436
        %s1438 = sand.u32 %s252, 1
        %s1439 = smul.addr %s1438, 8
        %s1440 = scalar_lea.vmem [#allocation15], %s1439
        // Predicated region
        $region61: #{tpu_custom_call.1} parent=39 // pred_check
          %p1441 = pneg %p178
        $region62: #{tpu_custom_call.1} parent=39 // pred_check_branch
          %1443 = sbr.rel (%p1441) target = $region64
        $region63: #{tpu_custom_call.1} parent=39 // pred_region
          %s1445 = ssub.s32 512, 512
          %1446 = vsyncadd %s1422, %s1445
          %s1447 = smul.addr %s38, 4
          %s1448 = sadd.s32 %s39, %s1447
          %s1449 = smul.addr %s1448, 128
          %s1450 = scalar_lea.hbm %s5, %s1449
          %s1451 = sshll.u32 %s1425, 4
          %s1452 = int_to_ptr.vmem [resolvable:$true] %s1451
          %1457 = dma.vmem_to_hbm [thread:$0]  %s1452, 512, %s1450, %s1422, 128, 128, 8
        $region64: #{tpu_custom_call.1} parent=39 // pred_fallthru
          _
        // Predicated region
        $region65: #{tpu_custom_call.1} parent=39 // pred_check
          %p1458 = pneg %p206
        $region66: #{tpu_custom_call.1} parent=39 // pred_check_branch
          %1460 = sbr.rel (%p1458) target = $region68
        $region67: #{tpu_custom_call.1} parent=39 // pred_region
          %s1462 = ssub.s32 512, 512
          %1463 = vsyncadd %s1427, %s1462
          %s1464 = smul.addr %s38, 4
          %s1465 = sadd.s32 %s39, %s1464
          %s1466 = smul.addr %s1465, 128
          %s1467 = scalar_lea.hbm %s6, %s1466
          %s1468 = sshll.u32 %s1430, 4
          %s1469 = int_to_ptr.vmem [resolvable:$true] %s1468
          %1474 = dma.vmem_to_hbm [thread:$0]  %s1469, 512, %s1467, %s1427, 128, 128, 8
        $region68: #{tpu_custom_call.1} parent=39 // pred_fallthru
          _
        // Predicated region
        $region69: #{tpu_custom_call.1} parent=39 // pred_check
          %p1475 = pneg %p234
        $region70: #{tpu_custom_call.1} parent=39 // pred_check_branch
          %1477 = sbr.rel (%p1475) target = $region72
        $region71: #{tpu_custom_call.1} parent=39 // pred_region
          %s1479 = ssub.s32 512, 512
          %1480 = vsyncadd %s1432, %s1479
          %s1481 = smul.addr %s38, 4
          %s1482 = sadd.s32 %s39, %s1481
          %s1483 = smul.addr %s1482, 128
          %s1484 = scalar_lea.hbm %s7, %s1483
          %s1485 = sshll.u32 %s1435, 4
          %s1486 = int_to_ptr.vmem [resolvable:$true] %s1485
          %1491 = dma.vmem_to_hbm [thread:$0]  %s1486, 512, %s1484, %s1432, 128, 128, 8
        $region72: #{tpu_custom_call.1} parent=39 // pred_fallthru
          _
        // Predicated region
        $region73: #{tpu_custom_call.1} parent=39 // pred_check
          %p1492 = pneg %p262
        $region74: #{tpu_custom_call.1} parent=39 // pred_check_branch
          %1494 = sbr.rel (%p1492) target = $region76
        $region75: #{tpu_custom_call.1} parent=39 // pred_region
          %s1496 = ssub.s32 128, 128
          %1497 = vsyncadd %s1437, %s1496
          %s1498 = sadd.s32 %s39, %s38
          %s1499 = smul.addr %s1498, 128
          %s1500 = scalar_lea.hbm %s8, %s1499
          %s1502 = sshll.u32 %s1440, 4
          %s1503 = int_to_ptr.vmem [resolvable:$true] %s1502
          %1505 = dma.vmem_to_hbm [thread:$0]  %s1503, 128, %s1500, %s1437
        $region76: #{tpu_custom_call.1} parent=39 // pred_fallthru
          _
      $region40: #{tpu_custom_call.1} parent=5 // pred_fallthru
        _
      %p1506 = scmp.le.s32.totalorder 2, %s29
      // Predicated region
      $region77: #{tpu_custom_call.1} parent=5 // pred_check
        %p1507 = pneg %p1506
      $region78: #{tpu_custom_call.1} parent=5 // pred_check_branch
        %1509 = sbr.rel (%p1507) target = $region80
      $region79: #{tpu_custom_call.1} parent=5 // pred_region
        %s1510 = ssub.s32 %s29, 2
        // Predicated region
        $region81: #{tpu_custom_call.1} parent=79 // pred_check
          %p1511 = pneg %p184
        $region82: #{tpu_custom_call.1} parent=79 // pred_check_branch
          %1513 = sbr.rel (%p1511) target = $region84
        $region83: #{tpu_custom_call.1} parent=79 // pred_region
          %s1514 = sand.u32 %s169, 1
          %s1515 = scalar_lea.sflag [#allocation4], %s1514
          %s1516 = sand.u32 %s169, 1
          %s1517 = smul.addr %s1516, 32
          %s1518 = scalar_lea.vmem [#allocation11], %s1517
          %1519 = dma.done %s1515, 512
        $region84: #{tpu_custom_call.1} parent=79 // pred_fallthru
          _
        // Predicated region
        $region85: #{tpu_custom_call.1} parent=79 // pred_check
          %p1520 = pneg %p212
        $region86: #{tpu_custom_call.1} parent=79 // pred_check_branch
          %1522 = sbr.rel (%p1520) target = $region88
        $region87: #{tpu_custom_call.1} parent=79 // pred_region
          %s1523 = sand.u32 %s35, 1
          %s1524 = scalar_lea.sflag [#allocation13], %s1523
          %s1525 = sand.u32 %s197, 1
          %s1526 = smul.addr %s1525, 32
          %s1527 = scalar_lea.vmem [#allocation12], %s1526
          %1528 = dma.done %s1524, 512
        $region88: #{tpu_custom_call.1} parent=79 // pred_fallthru
          _
        // Predicated region
        $region89: #{tpu_custom_call.1} parent=79 // pred_check
          %p1529 = pneg %p240
        $region90: #{tpu_custom_call.1} parent=79 // pred_check_branch
          %1531 = sbr.rel (%p1529) target = $region92
        $region91: #{tpu_custom_call.1} parent=79 // pred_region
          %s1532 = sand.u32 %s35, 1
          %s1533 = scalar_lea.sflag [#allocation13], %s1532
          %s1534 = sand.u32 %s225, 1
          %s1535 = smul.addr %s1534, 32
          %s1536 = scalar_lea.vmem [#allocation14], %s1535
          %1537 = dma.done %s1533, 512
        $region92: #{tpu_custom_call.1} parent=79 // pred_fallthru
          _
        // Predicated region
        $region93: #{tpu_custom_call.1} parent=79 // pred_check
          %p1538 = pneg %p268
        $region94: #{tpu_custom_call.1} parent=79 // pred_check_branch
          %1540 = sbr.rel (%p1538) target = $region96
        $region95: #{tpu_custom_call.1} parent=79 // pred_region
          %s1541 = sand.u32 %s253, 1
          %s1542 = scalar_lea.sflag [#allocation16], %s1541
          %s1543 = sand.u32 %s253, 1
          %s1544 = smul.addr %s1543, 8
          %s1545 = scalar_lea.vmem [#allocation15], %s1544
          %1546 = dma.done %s1542, 128
        $region96: #{tpu_custom_call.1} parent=79 // pred_fallthru
          _
      $region80: #{tpu_custom_call.1} parent=5 // pred_fallthru
        _
    $region6: #{tpu_custom_call.1} parent=1 // loop_footer
      %s33 = sadd.s32 1, %s29
    $region7: #{tpu_custom_call.1} parent=1 // loop_footer_branch
      %28 = sbr.rel target = $region3
    $region8: #{tpu_custom_call.1} parent=1 // loop_exit
      _
    %1547 = vsyncpa [#allocation3], 1
    %s1548 = scalar_lea.sflag [#allocation3], 1
    %1549 = vsyncpa %s1548, 1
    %1550 = vsyncpa [#allocation6], 1
    %1551 = vsyncpa [#allocation9], 1
    %1552 = vsyncpa [#allocation4], 1
    %s1553 = scalar_lea.sflag [#allocation4], 1
    %1554 = vsyncpa %s1553, 1
    %1555 = vsyncpa [#allocation13], 1
    %s1556 = scalar_lea.sflag [#allocation13], 1
    %1557 = vsyncpa %s1556, 1
    %1558 = vsyncpa [#allocation16], 1
    %s1559 = scalar_lea.sflag [#allocation16], 1
    %1560 = vsyncpa %s1559, 1

</llo_original>
